<compile_context>
chip_gen: v7x
topology: tpu7x:2x2x1
jax: 0.10.0
libtpu: 0.0.40
codegen_flags: <defaults>
</compile_context>

<pallas_src>
import jax
import jax.numpy as jnp
from jax import lax
from jax.experimental import pallas as pl
from jax.experimental.pallas import tpu as pltpu  # noqa: F401


# ----------------------------- Pallas kernel ------------------------------ #

def _build_fused_lstm_kernel(T, B, in_size, hidden, layers):
    """Fused multi-layer LSTM: whole forward in one kernel invocation.

    Inputs (all full-array VMEM blocks, no grid):
      x_ref : (T*B, Din)  time-major rows (row = t*B + b)
      per layer l: W_ih^T (Din_l, 4H), W_hh^T (H, 4H), b_ih+b_hh (1, 4H)
    Output:
      out_ref : (T*B, H) time-major rows of the last layer's hidden states.
    """
    f32 = jnp.float32

    def kernel(*refs):
        x_ref = refs[0]                      # (T*B, Din)
        w_refs = refs[1:1 + 3 * layers]
        out_ref = refs[1 + 3 * layers]       # (T*B, H)

        # Hoisted weight/bias loads (once per kernel, not per step).
        wih = [w_refs[3 * l][...] for l in range(layers)]       # (Din_l, 4H)
        whh = [w_refs[3 * l + 1][...] for l in range(layers)]   # (H, 4H)
        bias = [w_refs[3 * l + 2][...] for l in range(layers)]  # (1, 4H)

        # Layer-0 input projection hoisted off the recurrence: one MXU call
        # over all T*B rows, combined bias added once.
        ig0 = jnp.dot(x_ref[...], wih[0], preferred_element_type=f32) + bias[0]

        h = [None] * layers
        c = [None] * layers

        # T is small and static: full static unroll keeps every slice/store
        # index static and exposes the layer-wavefront to the scheduler.
        # The recurrence within a layer is strictly serial in t.
        for t in range(T):
            for l in range(layers):
                if l == 0:
                    # Contiguous sublane rows of the precomputed gates.
                    ig_t = ig0[t * B:(t + 1) * B, :]
                else:
                    # Wavefront: depends only on layer l-1 at the SAME step t,
                    # so it overlaps with layer l-1's step t+1.
                    ig_t = (jnp.dot(h[l - 1], wih[l],
                                    preferred_element_type=f32) + bias[l])

                if t == 0:
                    # h_{-1} = 0  =>  h @ W_hh == 0 exactly: skip the dot.
                    gates = ig_t
                else:
                    gates = ig_t + jnp.dot(h[l], whh[l],
                                           preferred_element_type=f32)

                # Full-width transcendentals over all 4H lanes (2 EUP pushes),
                # then cheap static lane slices for the gate combine.
                sig = jax.nn.sigmoid(gates)
                tnh = jnp.tanh(gates)
                i_g = sig[:, 0 * hidden:1 * hidden]
                f_g = sig[:, 1 * hidden:2 * hidden]
                g_g = tnh[:, 2 * hidden:3 * hidden]
                o_g = sig[:, 3 * hidden:4 * hidden]

                if t == 0:
                    # c_{-1} = 0  =>  f*c == 0 exactly: skip the FMA term.
                    c[l] = i_g * g_g
                else:
                    c[l] = f_g * c[l] + i_g * g_g
                h[l] = o_g * jnp.tanh(c[l])

            # Contiguous time-major block store of the last layer's h_t
            # (B sublane rows at a time; stores are off the dependence chain).
            out_ref[pl.ds(t * B, B), :] = h[layers - 1].astype(out_ref.dtype)

    return kernel


def _fused_lstm_forward_impl(x, kernel_weights):
    """x: (B, T, InSize) batch-first.  kernel_weights: flat tuple of
    (W_ih^T (Din,4H), W_hh^T (H,4H), b_ih+b_hh (1,4H)) per layer."""
    B, T, in_size = x.shape
    layers = len(kernel_weights) // 3
    hidden = kernel_weights[1].shape[0]      # W_hh^T is (H, 4H)

    # Time-major 2-D feed: row = t*B + b.  Tiny (1 KiB) wrapper-side reshuffle.
    x_tm = jnp.transpose(x.astype(jnp.float32), (1, 0, 2)).reshape(T * B, in_size)

    kernel = _build_fused_lstm_kernel(T, B, in_size, hidden, layers)

    out_tm = pl.pallas_call(
        kernel,
        out_shape=jax.ShapeDtypeStruct((T * B, hidden), jnp.float32),
    )(x_tm, *kernel_weights)

    # (T*B, H) time-major -> (B, T, H); 2 KiB transpose in the wrapper, free.
    return jnp.transpose(out_tm.reshape(T, B, hidden), (1, 0, 2))


_fused_lstm_forward = jax.jit(_fused_lstm_forward_impl)


# --------------------------- Module / parameters --------------------------- #

class LstmNetPMParams:
    """Parameters mirroring nn.LSTM(num_layers=L, batch_first=True).

    Keeps PyTorch-shaped weights (for the reference) and a pre-transposed,
    bias-combined flat tuple for the kernel (hoisted out of the forward pass).
    """

    def __init__(self, key, in_size, hidden, layers):
        self.in_size = in_size
        self.hidden = hidden
        self.layers = layers
        scale = 1.0 / (float(hidden) ** 0.5)

        self.torch_weights = []
        flat = []
        for l in range(layers):
            din = in_size if l == 0 else hidden
            key, k1, k2, k3, k4 = jax.random.split(key, 5)
            w_ih = jax.random.uniform(k1, (4 * hidden, din), jnp.float32, -scale, scale)
            w_hh = jax.random.uniform(k2, (4 * hidden, hidden), jnp.float32, -scale, scale)
            b_ih = jax.random.uniform(k3, (4 * hidden,), jnp.float32, -scale, scale)
            b_hh = jax.random.uniform(k4, (4 * hidden,), jnp.float32, -scale, scale)
            self.torch_weights.append((w_ih, w_hh, b_ih, b_hh))
            flat.extend([
                jnp.transpose(w_ih),                        # (Din, 4H)
                jnp.transpose(w_hh),                        # (H, 4H)
                (b_ih + b_hh).reshape(1, 4 * hidden),       # (1, 4H)
            ])
        self.kernel_weights = tuple(flat)


def lstm_net_pm_forward(params, x):
    """LstmNet_PM.forward: x (B, T, InLstmSize) -> c_out (B, T, HiddenSize).

    Initial (h0, c0) are zeros (matches init_hidden()); (h_n, c_n) is discarded
    just like the PyTorch forward.
    """
    return _fused_lstm_forward(x, params.kernel_weights)


# ------------------------------ Reference --------------------------------- #

def _reference_lstm(params, x):
    """Pure-JAX reference (lax.scan) of the same multi-layer LSTM."""
    B = x.shape[0]
    h_seq = jnp.transpose(x, (1, 0, 2)).astype(jnp.float32)   # (T, B, Din)
    for (w_ih, w_hh, b_ih, b_hh) in params.torch_weights:
        H = w_hh.shape[1]

        def step(carry, x_t):
            h, c = carry
            gates = x_t @ w_ih.T + b_ih + h @ w_hh.T + b_hh
            i = jax.nn.sigmoid(gates[:, 0 * H:1 * H])
            f = jax.nn.sigmoid(gates[:, 1 * H:2 * H])
            g = jnp.tanh(gates[:, 2 * H:3 * H])
            o = jax.nn.sigmoid(gates[:, 3 * H:4 * H])
            c_new = f * c + i * g
            h_new = o * jnp.tanh(c_new)
            return (h_new, c_new), h_new

        init = (jnp.zeros((B, H), jnp.float32), jnp.zeros((B, H), jnp.float32))
        _, h_seq = lax.scan(step, init, h_seq)
    return jnp.transpose(h_seq, (1, 0, 2))


# -------------------------------- Main ------------------------------------ #

if __name__ == "__main__":
    BATCH = 2
    SEQ_LEN = 8
    IN_LSTM_SIZE = 16
    HIDDEN_SIZE = 32
    LAYER_SIZE = 2

    root = jax.random.PRNGKey(0)
    k_params, k_x = jax.random.split(root)

    params = LstmNetPMParams(k_params, IN_LSTM_SIZE, HIDDEN_SIZE, LAYER_SIZE)
    x = jax.random.normal(k_x, (BATCH, SEQ_LEN, IN_LSTM_SIZE), jnp.float32)

    c_out = jax.block_until_ready(lstm_net_pm_forward(params, x))
    assert c_out.shape == (BATCH, SEQ_LEN, HIDDEN_SIZE), c_out.shape

    ref = jax.block_until_ready(_reference_lstm(params, x))
    if not jnp.allclose(c_out, ref, atol=1e-4, rtol=1e-4):
        raise AssertionError("Pallas fused LSTM output mismatch vs JAX reference")

    print("KERNEL_OK")
</pallas_src>

<mosaic_0001>
module attributes {stable_mosaic.version = 11 : i64} {
  func.func @kernel(%arg0: memref<16x16xf32, #tpu.memory_space<vmem>>, %arg1: memref<16x128xf32, #tpu.memory_space<vmem>>, %arg2: memref<32x128xf32, #tpu.memory_space<vmem>>, %arg3: memref<1x128xf32, #tpu.memory_space<vmem>>, %arg4: memref<32x128xf32, #tpu.memory_space<vmem>>, %arg5: memref<32x128xf32, #tpu.memory_space<vmem>>, %arg6: memref<1x128xf32, #tpu.memory_space<vmem>>, %arg7: memref<16x32xf32, #tpu.memory_space<vmem>>) attributes {dimension_semantics = [], scalar_prefetch = 0 : i64, scratch_operands = 0 : i64, tpu.core_type = #tpu.core_type<tc>} {
    %c0 = arith.constant 0 : index
    %c0_0 = arith.constant 0 : index
    %0 = vector.load %arg1[%c0, %c0_0] : memref<16x128xf32, #tpu.memory_space<vmem>>, vector<16x128xf32>
    %c0_1 = arith.constant 0 : index
    %c0_2 = arith.constant 0 : index
    %1 = vector.load %arg4[%c0_1, %c0_2] : memref<32x128xf32, #tpu.memory_space<vmem>>, vector<32x128xf32>
    %c0_3 = arith.constant 0 : index
    %c0_4 = arith.constant 0 : index
    %2 = vector.load %arg2[%c0_3, %c0_4] : memref<32x128xf32, #tpu.memory_space<vmem>>, vector<32x128xf32>
    %c0_5 = arith.constant 0 : index
    %c0_6 = arith.constant 0 : index
    %3 = vector.load %arg5[%c0_5, %c0_6] : memref<32x128xf32, #tpu.memory_space<vmem>>, vector<32x128xf32>
    %c0_7 = arith.constant 0 : index
    %c0_8 = arith.constant 0 : index
    %4 = vector.load %arg3[%c0_7, %c0_8] : memref<1x128xf32, #tpu.memory_space<vmem>>, vector<1x128xf32>
    %c0_9 = arith.constant 0 : index
    %c0_10 = arith.constant 0 : index
    %5 = vector.load %arg6[%c0_9, %c0_10] : memref<1x128xf32, #tpu.memory_space<vmem>>, vector<1x128xf32>
    %c0_11 = arith.constant 0 : index
    %c0_12 = arith.constant 0 : index
    %6 = vector.load %arg0[%c0_11, %c0_12] : memref<16x16xf32, #tpu.memory_space<vmem>>, vector<16x16xf32>
    %cst = arith.constant dense<0.000000e+00> : vector<16x128xf32>
    %7 = tpu.matmul %6, %0, %cst {dimension_numbers = #tpu.dot_dimension_numbers<[1], [0], [0], [1], [0, 0, 1, 1], [], []>} : vector<16x16xf32>, vector<16x128xf32>, vector<16x128xf32> -> vector<16x128xf32>
    %8 = vector.broadcast %4 : vector<1x128xf32> to vector<16x128xf32>
    %9 = arith.addf %7, %8 : vector<16x128xf32>
    %10 = vector.extract_strided_slice %9 {offsets = [0, 0], sizes = [2, 128], strides = [1, 1]} : vector<16x128xf32> to vector<2x128xf32>
    %11 = arith.negf %10 : vector<2x128xf32>
    %12 = math.exp %11 : vector<2x128xf32>
    %cst_13 = arith.constant 1.000000e+00 : f32
    %13 = vector.broadcast %cst_13 : f32 to vector<2x128xf32>
    %14 = arith.addf %13, %12 : vector<2x128xf32>
    %15 = arith.divf %13, %14 : vector<2x128xf32>
    %16 = math.tanh %10 : vector<2x128xf32>
    %17 = vector.extract_strided_slice %15 {offsets = [0, 0], sizes = [2, 32], strides = [1, 1]} : vector<2x128xf32> to vector<2x32xf32>
    %18 = vector.extract_strided_slice %16 {offsets = [0, 64], sizes = [2, 32], strides = [1, 1]} : vector<2x128xf32> to vector<2x32xf32>
    %19 = vector.extract_strided_slice %15 {offsets = [0, 96], sizes = [2, 32], strides = [1, 1]} : vector<2x128xf32> to vector<2x32xf32>
    %20 = arith.mulf %17, %18 : vector<2x32xf32>
    %21 = math.tanh %20 : vector<2x32xf32>
    %22 = arith.mulf %19, %21 : vector<2x32xf32>
    %cst_14 = arith.constant dense<0.000000e+00> : vector<2x128xf32>
    %23 = tpu.matmul %22, %1, %cst_14 {dimension_numbers = #tpu.dot_dimension_numbers<[1], [0], [0], [1], [0, 0, 1, 1], [], []>} : vector<2x32xf32>, vector<32x128xf32>, vector<2x128xf32> -> vector<2x128xf32>
    %24 = vector.broadcast %5 : vector<1x128xf32> to vector<2x128xf32>
    %25 = arith.addf %23, %24 : vector<2x128xf32>
    %26 = arith.negf %25 : vector<2x128xf32>
    %27 = math.exp %26 : vector<2x128xf32>
    %cst_15 = arith.constant 1.000000e+00 : f32
    %28 = vector.broadcast %cst_15 : f32 to vector<2x128xf32>
    %29 = arith.addf %28, %27 : vector<2x128xf32>
    %30 = arith.divf %28, %29 : vector<2x128xf32>
    %31 = math.tanh %25 : vector<2x128xf32>
    %32 = vector.extract_strided_slice %30 {offsets = [0, 0], sizes = [2, 32], strides = [1, 1]} : vector<2x128xf32> to vector<2x32xf32>
    %33 = vector.extract_strided_slice %31 {offsets = [0, 64], sizes = [2, 32], strides = [1, 1]} : vector<2x128xf32> to vector<2x32xf32>
    %34 = vector.extract_strided_slice %30 {offsets = [0, 96], sizes = [2, 32], strides = [1, 1]} : vector<2x128xf32> to vector<2x32xf32>
    %35 = arith.mulf %32, %33 : vector<2x32xf32>
    %36 = math.tanh %35 : vector<2x32xf32>
    %37 = arith.mulf %34, %36 : vector<2x32xf32>
    %c0_16 = arith.constant 0 : index
    %c0_17 = arith.constant 0 : index
    %38 = vector.load %arg7[%c0_16, %c0_17] : memref<16x32xf32, #tpu.memory_space<vmem>>, vector<2x32xf32>
    tpu.vector_store %arg7[%c0_16, %c0_17], %37 {strides = array<i32>} : memref<16x32xf32, #tpu.memory_space<vmem>>, vector<2x32xf32>,
    %39 = vector.extract_strided_slice %9 {offsets = [2, 0], sizes = [2, 128], strides = [1, 1]} : vector<16x128xf32> to vector<2x128xf32>
    %cst_18 = arith.constant dense<0.000000e+00> : vector<2x128xf32>
    %40 = tpu.matmul %22, %2, %cst_18 {dimension_numbers = #tpu.dot_dimension_numbers<[1], [0], [0], [1], [0, 0, 1, 1], [], []>} : vector<2x32xf32>, vector<32x128xf32>, vector<2x128xf32> -> vector<2x128xf32>
    %41 = arith.addf %39, %40 : vector<2x128xf32>
    %42 = arith.negf %41 : vector<2x128xf32>
    %43 = math.exp %42 : vector<2x128xf32>
    %cst_19 = arith.constant 1.000000e+00 : f32
    %44 = vector.broadcast %cst_19 : f32 to vector<2x128xf32>
    %45 = arith.addf %44, %43 : vector<2x128xf32>
    %46 = arith.divf %44, %45 : vector<2x128xf32>
    %47 = math.tanh %41 : vector<2x128xf32>
    %48 = vector.extract_strided_slice %46 {offsets = [0, 0], sizes = [2, 32], strides = [1, 1]} : vector<2x128xf32> to vector<2x32xf32>
    %49 = vector.extract_strided_slice %46 {offsets = [0, 32], sizes = [2, 32], strides = [1, 1]} : vector<2x128xf32> to vector<2x32xf32>
    %50 = vector.extract_strided_slice %47 {offsets = [0, 64], sizes = [2, 32], strides = [1, 1]} : vector<2x128xf32> to vector<2x32xf32>
    %51 = vector.extract_strided_slice %46 {offsets = [0, 96], sizes = [2, 32], strides = [1, 1]} : vector<2x128xf32> to vector<2x32xf32>
    %52 = arith.mulf %49, %20 : vector<2x32xf32>
    %53 = arith.mulf %48, %50 : vector<2x32xf32>
    %54 = arith.addf %52, %53 : vector<2x32xf32>
    %55 = math.tanh %54 : vector<2x32xf32>
    %56 = arith.mulf %51, %55 : vector<2x32xf32>
    %cst_20 = arith.constant dense<0.000000e+00> : vector<2x128xf32>
    %57 = tpu.matmul %56, %1, %cst_20 {dimension_numbers = #tpu.dot_dimension_numbers<[1], [0], [0], [1], [0, 0, 1, 1], [], []>} : vector<2x32xf32>, vector<32x128xf32>, vector<2x128xf32> -> vector<2x128xf32>
    %58 = vector.broadcast %5 : vector<1x128xf32> to vector<2x128xf32>
    %59 = arith.addf %57, %58 : vector<2x128xf32>
    %cst_21 = arith.constant dense<0.000000e+00> : vector<2x128xf32>
    %60 = tpu.matmul %37, %3, %cst_21 {dimension_numbers = #tpu.dot_dimension_numbers<[1], [0], [0], [1], [0, 0, 1, 1], [], []>} : vector<2x32xf32>, vector<32x128xf32>, vector<2x128xf32> -> vector<2x128xf32>
    %61 = arith.addf %59, %60 : vector<2x128xf32>
    %62 = arith.negf %61 : vector<2x128xf32>
    %63 = math.exp %62 : vector<2x128xf32>
    %cst_22 = arith.constant 1.000000e+00 : f32
    %64 = vector.broadcast %cst_22 : f32 to vector<2x128xf32>
    %65 = arith.addf %64, %63 : vector<2x128xf32>
    %66 = arith.divf %64, %65 : vector<2x128xf32>
    %67 = math.tanh %61 : vector<2x128xf32>
    %68 = vector.extract_strided_slice %66 {offsets = [0, 0], sizes = [2, 32], strides = [1, 1]} : vector<2x128xf32> to vector<2x32xf32>
    %69 = vector.extract_strided_slice %66 {offsets = [0, 32], sizes = [2, 32], strides = [1, 1]} : vector<2x128xf32> to vector<2x32xf32>
    %70 = vector.extract_strided_slice %67 {offsets = [0, 64], sizes = [2, 32], strides = [1, 1]} : vector<2x128xf32> to vector<2x32xf32>
    %71 = vector.extract_strided_slice %66 {offsets = [0, 96], sizes = [2, 32], strides = [1, 1]} : vector<2x128xf32> to vector<2x32xf32>
    %72 = arith.mulf %69, %35 : vector<2x32xf32>
    %73 = arith.mulf %68, %70 : vector<2x32xf32>
    %74 = arith.addf %72, %73 : vector<2x32xf32>
    %75 = math.tanh %74 : vector<2x32xf32>
    %76 = arith.mulf %71, %75 : vector<2x32xf32>
    %c2 = arith.constant 2 : index
    %c0_23 = arith.constant 0 : index
    %77 = vector.load %arg7[%c2, %c0_23] : memref<16x32xf32, #tpu.memory_space<vmem>>, vector<2x32xf32>
    tpu.vector_store %arg7[%c2, %c0_23], %76 {strides = array<i32>} : memref<16x32xf32, #tpu.memory_space<vmem>>, vector<2x32xf32>,
    %78 = vector.extract_strided_slice %9 {offsets = [4, 0], sizes = [2, 128], strides = [1, 1]} : vector<16x128xf32> to vector<2x128xf32>
    %cst_24 = arith.constant dense<0.000000e+00> : vector<2x128xf32>
    %79 = tpu.matmul %56, %2, %cst_24 {dimension_numbers = #tpu.dot_dimension_numbers<[1], [0], [0], [1], [0, 0, 1, 1], [], []>} : vector<2x32xf32>, vector<32x128xf32>, vector<2x128xf32> -> vector<2x128xf32>
    %80 = arith.addf %78, %79 : vector<2x128xf32>
    %81 = arith.negf %80 : vector<2x128xf32>
    %82 = math.exp %81 : vector<2x128xf32>
    %cst_25 = arith.constant 1.000000e+00 : f32
    %83 = vector.broadcast %cst_25 : f32 to vector<2x128xf32>
    %84 = arith.addf %83, %82 : vector<2x128xf32>
    %85 = arith.divf %83, %84 : vector<2x128xf32>
    %86 = math.tanh %80 : vector<2x128xf32>
    %87 = vector.extract_strided_slice %85 {offsets = [0, 0], sizes = [2, 32], strides = [1, 1]} : vector<2x128xf32> to vector<2x32xf32>
    %88 = vector.extract_strided_slice %85 {offsets = [0, 32], sizes = [2, 32], strides = [1, 1]} : vector<2x128xf32> to vector<2x32xf32>
    %89 = vector.extract_strided_slice %86 {offsets = [0, 64], sizes = [2, 32], strides = [1, 1]} : vector<2x128xf32> to vector<2x32xf32>
    %90 = vector.extract_strided_slice %85 {offsets = [0, 96], sizes = [2, 32], strides = [1, 1]} : vector<2x128xf32> to vector<2x32xf32>
    %91 = arith.mulf %88, %54 : vector<2x32xf32>
    %92 = arith.mulf %87, %89 : vector<2x32xf32>
    %93 = arith.addf %91, %92 : vector<2x32xf32>
    %94 = math.tanh %93 : vector<2x32xf32>
    %95 = arith.mulf %90, %94 : vector<2x32xf32>
    %cst_26 = arith.constant dense<0.000000e+00> : vector<2x128xf32>
    %96 = tpu.matmul %95, %1, %cst_26 {dimension_numbers = #tpu.dot_dimension_numbers<[1], [0], [0], [1], [0, 0, 1, 1], [], []>} : vector<2x32xf32>, vector<32x128xf32>, vector<2x128xf32> -> vector<2x128xf32>
    %97 = vector.broadcast %5 : vector<1x128xf32> to vector<2x128xf32>
    %98 = arith.addf %96, %97 : vector<2x128xf32>
    %cst_27 = arith.constant dense<0.000000e+00> : vector<2x128xf32>
    %99 = tpu.matmul %76, %3, %cst_27 {dimension_numbers = #tpu.dot_dimension_numbers<[1], [0], [0], [1], [0, 0, 1, 1], [], []>} : vector<2x32xf32>, vector<32x128xf32>, vector<2x128xf32> -> vector<2x128xf32>
    %100 = arith.addf %98, %99 : vector<2x128xf32>
    %101 = arith.negf %100 : vector<2x128xf32>
    %102 = math.exp %101 : vector<2x128xf32>
    %cst_28 = arith.constant 1.000000e+00 : f32
    %103 = vector.broadcast %cst_28 : f32 to vector<2x128xf32>
    %104 = arith.addf %103, %102 : vector<2x128xf32>
    %105 = arith.divf %103, %104 : vector<2x128xf32>
    %106 = math.tanh %100 : vector<2x128xf32>
    %107 = vector.extract_strided_slice %105 {offsets = [0, 0], sizes = [2, 32], strides = [1, 1]} : vector<2x128xf32> to vector<2x32xf32>
    %108 = vector.extract_strided_slice %105 {offsets = [0, 32], sizes = [2, 32], strides = [1, 1]} : vector<2x128xf32> to vector<2x32xf32>
    %109 = vector.extract_strided_slice %106 {offsets = [0, 64], sizes = [2, 32], strides = [1, 1]} : vector<2x128xf32> to vector<2x32xf32>
    %110 = vector.extract_strided_slice %105 {offsets = [0, 96], sizes = [2, 32], strides = [1, 1]} : vector<2x128xf32> to vector<2x32xf32>
    %111 = arith.mulf %108, %74 : vector<2x32xf32>
    %112 = arith.mulf %107, %109 : vector<2x32xf32>
    %113 = arith.addf %111, %112 : vector<2x32xf32>
    %114 = math.tanh %113 : vector<2x32xf32>
    %115 = arith.mulf %110, %114 : vector<2x32xf32>
    %c4 = arith.constant 4 : index
    %c0_29 = arith.constant 0 : index
    %116 = vector.load %arg7[%c4, %c0_29] : memref<16x32xf32, #tpu.memory_space<vmem>>, vector<2x32xf32>
    tpu.vector_store %arg7[%c4, %c0_29], %115 {strides = array<i32>} : memref<16x32xf32, #tpu.memory_space<vmem>>, vector<2x32xf32>,
    %117 = vector.extract_strided_slice %9 {offsets = [6, 0], sizes = [2, 128], strides = [1, 1]} : vector<16x128xf32> to vector<2x128xf32>
    %cst_30 = arith.constant dense<0.000000e+00> : vector<2x128xf32>
    %118 = tpu.matmul %95, %2, %cst_30 {dimension_numbers = #tpu.dot_dimension_numbers<[1], [0], [0], [1], [0, 0, 1, 1], [], []>} : vector<2x32xf32>, vector<32x128xf32>, vector<2x128xf32> -> vector<2x128xf32>
    %119 = arith.addf %117, %118 : vector<2x128xf32>
    %120 = arith.negf %119 : vector<2x128xf32>
    %121 = math.exp %120 : vector<2x128xf32>
    %cst_31 = arith.constant 1.000000e+00 : f32
    %122 = vector.broadcast %cst_31 : f32 to vector<2x128xf32>
    %123 = arith.addf %122, %121 : vector<2x128xf32>
    %124 = arith.divf %122, %123 : vector<2x128xf32>
    %125 = math.tanh %119 : vector<2x128xf32>
    %126 = vector.extract_strided_slice %124 {offsets = [0, 0], sizes = [2, 32], strides = [1, 1]} : vector<2x128xf32> to vector<2x32xf32>
    %127 = vector.extract_strided_slice %124 {offsets = [0, 32], sizes = [2, 32], strides = [1, 1]} : vector<2x128xf32> to vector<2x32xf32>
    %128 = vector.extract_strided_slice %125 {offsets = [0, 64], sizes = [2, 32], strides = [1, 1]} : vector<2x128xf32> to vector<2x32xf32>
    %129 = vector.extract_strided_slice %124 {offsets = [0, 96], sizes = [2, 32], strides = [1, 1]} : vector<2x128xf32> to vector<2x32xf32>
    %130 = arith.mulf %127, %93 : vector<2x32xf32>
    %131 = arith.mulf %126, %128 : vector<2x32xf32>
    %132 = arith.addf %130, %131 : vector<2x32xf32>
    %133 = math.tanh %132 : vector<2x32xf32>
    %134 = arith.mulf %129, %133 : vector<2x32xf32>
    %cst_32 = arith.constant dense<0.000000e+00> : vector<2x128xf32>
    %135 = tpu.matmul %134, %1, %cst_32 {dimension_numbers = #tpu.dot_dimension_numbers<[1], [0], [0], [1], [0, 0, 1, 1], [], []>} : vector<2x32xf32>, vector<32x128xf32>, vector<2x128xf32> -> vector<2x128xf32>
    %136 = vector.broadcast %5 : vector<1x128xf32> to vector<2x128xf32>
    %137 = arith.addf %135, %136 : vector<2x128xf32>
    %cst_33 = arith.constant dense<0.000000e+00> : vector<2x128xf32>
    %138 = tpu.matmul %115, %3, %cst_33 {dimension_numbers = #tpu.dot_dimension_numbers<[1], [0], [0], [1], [0, 0, 1, 1], [], []>} : vector<2x32xf32>, vector<32x128xf32>, vector<2x128xf32> -> vector<2x128xf32>
    %139 = arith.addf %137, %138 : vector<2x128xf32>
    %140 = arith.negf %139 : vector<2x128xf32>
    %141 = math.exp %140 : vector<2x128xf32>
    %cst_34 = arith.constant 1.000000e+00 : f32
    %142 = vector.broadcast %cst_34 : f32 to vector<2x128xf32>
    %143 = arith.addf %142, %141 : vector<2x128xf32>
    %144 = arith.divf %142, %143 : vector<2x128xf32>
    %145 = math.tanh %139 : vector<2x128xf32>
    %146 = vector.extract_strided_slice %144 {offsets = [0, 0], sizes = [2, 32], strides = [1, 1]} : vector<2x128xf32> to vector<2x32xf32>
    %147 = vector.extract_strided_slice %144 {offsets = [0, 32], sizes = [2, 32], strides = [1, 1]} : vector<2x128xf32> to vector<2x32xf32>
    %148 = vector.extract_strided_slice %145 {offsets = [0, 64], sizes = [2, 32], strides = [1, 1]} : vector<2x128xf32> to vector<2x32xf32>
    %149 = vector.extract_strided_slice %144 {offsets = [0, 96], sizes = [2, 32], strides = [1, 1]} : vector<2x128xf32> to vector<2x32xf32>
    %150 = arith.mulf %147, %113 : vector<2x32xf32>
    %151 = arith.mulf %146, %148 : vector<2x32xf32>
    %152 = arith.addf %150, %151 : vector<2x32xf32>
    %153 = math.tanh %152 : vector<2x32xf32>
    %154 = arith.mulf %149, %153 : vector<2x32xf32>
    %c6 = arith.constant 6 : index
    %c0_35 = arith.constant 0 : index
    %155 = vector.load %arg7[%c6, %c0_35] : memref<16x32xf32, #tpu.memory_space<vmem>>, vector<2x32xf32>
    tpu.vector_store %arg7[%c6, %c0_35], %154 {strides = array<i32>} : memref<16x32xf32, #tpu.memory_space<vmem>>, vector<2x32xf32>,
    %156 = vector.extract_strided_slice %9 {offsets = [8, 0], sizes = [2, 128], strides = [1, 1]} : vector<16x128xf32> to vector<2x128xf32>
    %cst_36 = arith.constant dense<0.000000e+00> : vector<2x128xf32>
    %157 = tpu.matmul %134, %2, %cst_36 {dimension_numbers = #tpu.dot_dimension_numbers<[1], [0], [0], [1], [0, 0, 1, 1], [], []>} : vector<2x32xf32>, vector<32x128xf32>, vector<2x128xf32> -> vector<2x128xf32>
    %158 = arith.addf %156, %157 : vector<2x128xf32>
    %159 = arith.negf %158 : vector<2x128xf32>
    %160 = math.exp %159 : vector<2x128xf32>
    %cst_37 = arith.constant 1.000000e+00 : f32
    %161 = vector.broadcast %cst_37 : f32 to vector<2x128xf32>
    %162 = arith.addf %161, %160 : vector<2x128xf32>
    %163 = arith.divf %161, %162 : vector<2x128xf32>
    %164 = math.tanh %158 : vector<2x128xf32>
    %165 = vector.extract_strided_slice %163 {offsets = [0, 0], sizes = [2, 32], strides = [1, 1]} : vector<2x128xf32> to vector<2x32xf32>
    %166 = vector.extract_strided_slice %163 {offsets = [0, 32], sizes = [2, 32], strides = [1, 1]} : vector<2x128xf32> to vector<2x32xf32>
    %167 = vector.extract_strided_slice %164 {offsets = [0, 64], sizes = [2, 32], strides = [1, 1]} : vector<2x128xf32> to vector<2x32xf32>
    %168 = vector.extract_strided_slice %163 {offsets = [0, 96], sizes = [2, 32], strides = [1, 1]} : vector<2x128xf32> to vector<2x32xf32>
    %169 = arith.mulf %166, %132 : vector<2x32xf32>
    %170 = arith.mulf %165, %167 : vector<2x32xf32>
    %171 = arith.addf %169, %170 : vector<2x32xf32>
    %172 = math.tanh %171 : vector<2x32xf32>
    %173 = arith.mulf %168, %172 : vector<2x32xf32>
    %cst_38 = arith.constant dense<0.000000e+00> : vector<2x128xf32>
    %174 = tpu.matmul %173, %1, %cst_38 {dimension_numbers = #tpu.dot_dimension_numbers<[1], [0], [0], [1], [0, 0, 1, 1], [], []>} : vector<2x32xf32>, vector<32x128xf32>, vector<2x128xf32> -> vector<2x128xf32>
    %175 = vector.broadcast %5 : vector<1x128xf32> to vector<2x128xf32>
    %176 = arith.addf %174, %175 : vector<2x128xf32>
    %cst_39 = arith.constant dense<0.000000e+00> : vector<2x128xf32>
    %177 = tpu.matmul %154, %3, %cst_39 {dimension_numbers = #tpu.dot_dimension_numbers<[1], [0], [0], [1], [0, 0, 1, 1], [], []>} : vector<2x32xf32>, vector<32x128xf32>, vector<2x128xf32> -> vector<2x128xf32>
    %178 = arith.addf %176, %177 : vector<2x128xf32>
    %179 = arith.negf %178 : vector<2x128xf32>
    %180 = math.exp %179 : vector<2x128xf32>
    %cst_40 = arith.constant 1.000000e+00 : f32
    %181 = vector.broadcast %cst_40 : f32 to vector<2x128xf32>
    %182 = arith.addf %181, %180 : vector<2x128xf32>
    %183 = arith.divf %181, %182 : vector<2x128xf32>
    %184 = math.tanh %178 : vector<2x128xf32>
    %185 = vector.extract_strided_slice %183 {offsets = [0, 0], sizes = [2, 32], strides = [1, 1]} : vector<2x128xf32> to vector<2x32xf32>
    %186 = vector.extract_strided_slice %183 {offsets = [0, 32], sizes = [2, 32], strides = [1, 1]} : vector<2x128xf32> to vector<2x32xf32>
    %187 = vector.extract_strided_slice %184 {offsets = [0, 64], sizes = [2, 32], strides = [1, 1]} : vector<2x128xf32> to vector<2x32xf32>
    %188 = vector.extract_strided_slice %183 {offsets = [0, 96], sizes = [2, 32], strides = [1, 1]} : vector<2x128xf32> to vector<2x32xf32>
    %189 = arith.mulf %186, %152 : vector<2x32xf32>
    %190 = arith.mulf %185, %187 : vector<2x32xf32>
    %191 = arith.addf %189, %190 : vector<2x32xf32>
    %192 = math.tanh %191 : vector<2x32xf32>
    %193 = arith.mulf %188, %192 : vector<2x32xf32>
    %c8 = arith.constant 8 : index
    %c0_41 = arith.constant 0 : index
    %194 = vector.load %arg7[%c8, %c0_41] : memref<16x32xf32, #tpu.memory_space<vmem>>, vector<2x32xf32>
    tpu.vector_store %arg7[%c8, %c0_41], %193 {strides = array<i32>} : memref<16x32xf32, #tpu.memory_space<vmem>>, vector<2x32xf32>,
    %195 = vector.extract_strided_slice %9 {offsets = [10, 0], sizes = [2, 128], strides = [1, 1]} : vector<16x128xf32> to vector<2x128xf32>
    %cst_42 = arith.constant dense<0.000000e+00> : vector<2x128xf32>
    %196 = tpu.matmul %173, %2, %cst_42 {dimension_numbers = #tpu.dot_dimension_numbers<[1], [0], [0], [1], [0, 0, 1, 1], [], []>} : vector<2x32xf32>, vector<32x128xf32>, vector<2x128xf32> -> vector<2x128xf32>
    %197 = arith.addf %195, %196 : vector<2x128xf32>
    %198 = arith.negf %197 : vector<2x128xf32>
    %199 = math.exp %198 : vector<2x128xf32>
    %cst_43 = arith.constant 1.000000e+00 : f32
    %200 = vector.broadcast %cst_43 : f32 to vector<2x128xf32>
    %201 = arith.addf %200, %199 : vector<2x128xf32>
    %202 = arith.divf %200, %201 : vector<2x128xf32>
    %203 = math.tanh %197 : vector<2x128xf32>
    %204 = vector.extract_strided_slice %202 {offsets = [0, 0], sizes = [2, 32], strides = [1, 1]} : vector<2x128xf32> to vector<2x32xf32>
    %205 = vector.extract_strided_slice %202 {offsets = [0, 32], sizes = [2, 32], strides = [1, 1]} : vector<2x128xf32> to vector<2x32xf32>
    %206 = vector.extract_strided_slice %203 {offsets = [0, 64], sizes = [2, 32], strides = [1, 1]} : vector<2x128xf32> to vector<2x32xf32>
    %207 = vector.extract_strided_slice %202 {offsets = [0, 96], sizes = [2, 32], strides = [1, 1]} : vector<2x128xf32> to vector<2x32xf32>
    %208 = arith.mulf %205, %171 : vector<2x32xf32>
    %209 = arith.mulf %204, %206 : vector<2x32xf32>
    %210 = arith.addf %208, %209 : vector<2x32xf32>
    %211 = math.tanh %210 : vector<2x32xf32>
    %212 = arith.mulf %207, %211 : vector<2x32xf32>
    %cst_44 = arith.constant dense<0.000000e+00> : vector<2x128xf32>
    %213 = tpu.matmul %212, %1, %cst_44 {dimension_numbers = #tpu.dot_dimension_numbers<[1], [0], [0], [1], [0, 0, 1, 1], [], []>} : vector<2x32xf32>, vector<32x128xf32>, vector<2x128xf32> -> vector<2x128xf32>
    %214 = vector.broadcast %5 : vector<1x128xf32> to vector<2x128xf32>
    %215 = arith.addf %213, %214 : vector<2x128xf32>
    %cst_45 = arith.constant dense<0.000000e+00> : vector<2x128xf32>
    %216 = tpu.matmul %193, %3, %cst_45 {dimension_numbers = #tpu.dot_dimension_numbers<[1], [0], [0], [1], [0, 0, 1, 1], [], []>} : vector<2x32xf32>, vector<32x128xf32>, vector<2x128xf32> -> vector<2x128xf32>
    %217 = arith.addf %215, %216 : vector<2x128xf32>
    %218 = arith.negf %217 : vector<2x128xf32>
    %219 = math.exp %218 : vector<2x128xf32>
    %cst_46 = arith.constant 1.000000e+00 : f32
    %220 = vector.broadcast %cst_46 : f32 to vector<2x128xf32>
    %221 = arith.addf %220, %219 : vector<2x128xf32>
    %222 = arith.divf %220, %221 : vector<2x128xf32>
    %223 = math.tanh %217 : vector<2x128xf32>
    %224 = vector.extract_strided_slice %222 {offsets = [0, 0], sizes = [2, 32], strides = [1, 1]} : vector<2x128xf32> to vector<2x32xf32>
    %225 = vector.extract_strided_slice %222 {offsets = [0, 32], sizes = [2, 32], strides = [1, 1]} : vector<2x128xf32> to vector<2x32xf32>
    %226 = vector.extract_strided_slice %223 {offsets = [0, 64], sizes = [2, 32], strides = [1, 1]} : vector<2x128xf32> to vector<2x32xf32>
    %227 = vector.extract_strided_slice %222 {offsets = [0, 96], sizes = [2, 32], strides = [1, 1]} : vector<2x128xf32> to vector<2x32xf32>
    %228 = arith.mulf %225, %191 : vector<2x32xf32>
    %229 = arith.mulf %224, %226 : vector<2x32xf32>
    %230 = arith.addf %228, %229 : vector<2x32xf32>
    %231 = math.tanh %230 : vector<2x32xf32>
    %232 = arith.mulf %227, %231 : vector<2x32xf32>
    %c10 = arith.constant 10 : index
    %c0_47 = arith.constant 0 : index
    %233 = vector.load %arg7[%c10, %c0_47] : memref<16x32xf32, #tpu.memory_space<vmem>>, vector<2x32xf32>
    tpu.vector_store %arg7[%c10, %c0_47], %232 {strides = array<i32>} : memref<16x32xf32, #tpu.memory_space<vmem>>, vector<2x32xf32>,
    %234 = vector.extract_strided_slice %9 {offsets = [12, 0], sizes = [2, 128], strides = [1, 1]} : vector<16x128xf32> to vector<2x128xf32>
    %cst_48 = arith.constant dense<0.000000e+00> : vector<2x128xf32>
    %235 = tpu.matmul %212, %2, %cst_48 {dimension_numbers = #tpu.dot_dimension_numbers<[1], [0], [0], [1], [0, 0, 1, 1], [], []>} : vector<2x32xf32>, vector<32x128xf32>, vector<2x128xf32> -> vector<2x128xf32>
    %236 = arith.addf %234, %235 : vector<2x128xf32>
    %237 = arith.negf %236 : vector<2x128xf32>
    %238 = math.exp %237 : vector<2x128xf32>
    %cst_49 = arith.constant 1.000000e+00 : f32
    %239 = vector.broadcast %cst_49 : f32 to vector<2x128xf32>
    %240 = arith.addf %239, %238 : vector<2x128xf32>
    %241 = arith.divf %239, %240 : vector<2x128xf32>
    %242 = math.tanh %236 : vector<2x128xf32>
    %243 = vector.extract_strided_slice %241 {offsets = [0, 0], sizes = [2, 32], strides = [1, 1]} : vector<2x128xf32> to vector<2x32xf32>
    %244 = vector.extract_strided_slice %241 {offsets = [0, 32], sizes = [2, 32], strides = [1, 1]} : vector<2x128xf32> to vector<2x32xf32>
    %245 = vector.extract_strided_slice %242 {offsets = [0, 64], sizes = [2, 32], strides = [1, 1]} : vector<2x128xf32> to vector<2x32xf32>
    %246 = vector.extract_strided_slice %241 {offsets = [0, 96], sizes = [2, 32], strides = [1, 1]} : vector<2x128xf32> to vector<2x32xf32>
    %247 = arith.mulf %244, %210 : vector<2x32xf32>
    %248 = arith.mulf %243, %245 : vector<2x32xf32>
    %249 = arith.addf %247, %248 : vector<2x32xf32>
    %250 = math.tanh %249 : vector<2x32xf32>
    %251 = arith.mulf %246, %250 : vector<2x32xf32>
    %cst_50 = arith.constant dense<0.000000e+00> : vector<2x128xf32>
    %252 = tpu.matmul %251, %1, %cst_50 {dimension_numbers = #tpu.dot_dimension_numbers<[1], [0], [0], [1], [0, 0, 1, 1], [], []>} : vector<2x32xf32>, vector<32x128xf32>, vector<2x128xf32> -> vector<2x128xf32>
    %253 = vector.broadcast %5 : vector<1x128xf32> to vector<2x128xf32>
    %254 = arith.addf %252, %253 : vector<2x128xf32>
    %cst_51 = arith.constant dense<0.000000e+00> : vector<2x128xf32>
    %255 = tpu.matmul %232, %3, %cst_51 {dimension_numbers = #tpu.dot_dimension_numbers<[1], [0], [0], [1], [0, 0, 1, 1], [], []>} : vector<2x32xf32>, vector<32x128xf32>, vector<2x128xf32> -> vector<2x128xf32>
    %256 = arith.addf %254, %255 : vector<2x128xf32>
    %257 = arith.negf %256 : vector<2x128xf32>
    %258 = math.exp %257 : vector<2x128xf32>
    %cst_52 = arith.constant 1.000000e+00 : f32
    %259 = vector.broadcast %cst_52 : f32 to vector<2x128xf32>
    %260 = arith.addf %259, %258 : vector<2x128xf32>
    %261 = arith.divf %259, %260 : vector<2x128xf32>
    %262 = math.tanh %256 : vector<2x128xf32>
    %263 = vector.extract_strided_slice %261 {offsets = [0, 0], sizes = [2, 32], strides = [1, 1]} : vector<2x128xf32> to vector<2x32xf32>
    %264 = vector.extract_strided_slice %261 {offsets = [0, 32], sizes = [2, 32], strides = [1, 1]} : vector<2x128xf32> to vector<2x32xf32>
    %265 = vector.extract_strided_slice %262 {offsets = [0, 64], sizes = [2, 32], strides = [1, 1]} : vector<2x128xf32> to vector<2x32xf32>
    %266 = vector.extract_strided_slice %261 {offsets = [0, 96], sizes = [2, 32], strides = [1, 1]} : vector<2x128xf32> to vector<2x32xf32>
    %267 = arith.mulf %264, %230 : vector<2x32xf32>
    %268 = arith.mulf %263, %265 : vector<2x32xf32>
    %269 = arith.addf %267, %268 : vector<2x32xf32>
    %270 = math.tanh %269 : vector<2x32xf32>
    %271 = arith.mulf %266, %270 : vector<2x32xf32>
    %c12 = arith.constant 12 : index
    %c0_53 = arith.constant 0 : index
    %272 = vector.load %arg7[%c12, %c0_53] : memref<16x32xf32, #tpu.memory_space<vmem>>, vector<2x32xf32>
    tpu.vector_store %arg7[%c12, %c0_53], %271 {strides = array<i32>} : memref<16x32xf32, #tpu.memory_space<vmem>>, vector<2x32xf32>,
    %273 = vector.extract_strided_slice %9 {offsets = [14, 0], sizes = [2, 128], strides = [1, 1]} : vector<16x128xf32> to vector<2x128xf32>
    %cst_54 = arith.constant dense<0.000000e+00> : vector<2x128xf32>
    %274 = tpu.matmul %251, %2, %cst_54 {dimension_numbers = #tpu.dot_dimension_numbers<[1], [0], [0], [1], [0, 0, 1, 1], [], []>} : vector<2x32xf32>, vector<32x128xf32>, vector<2x128xf32> -> vector<2x128xf32>
    %275 = arith.addf %273, %274 : vector<2x128xf32>
    %276 = arith.negf %275 : vector<2x128xf32>
    %277 = math.exp %276 : vector<2x128xf32>
    %cst_55 = arith.constant 1.000000e+00 : f32
    %278 = vector.broadcast %cst_55 : f32 to vector<2x128xf32>
    %279 = arith.addf %278, %277 : vector<2x128xf32>
    %280 = arith.divf %278, %279 : vector<2x128xf32>
    %281 = math.tanh %275 : vector<2x128xf32>
    %282 = vector.extract_strided_slice %280 {offsets = [0, 0], sizes = [2, 32], strides = [1, 1]} : vector<2x128xf32> to vector<2x32xf32>
    %283 = vector.extract_strided_slice %280 {offsets = [0, 32], sizes = [2, 32], strides = [1, 1]} : vector<2x128xf32> to vector<2x32xf32>
    %284 = vector.extract_strided_slice %281 {offsets = [0, 64], sizes = [2, 32], strides = [1, 1]} : vector<2x128xf32> to vector<2x32xf32>
    %285 = vector.extract_strided_slice %280 {offsets = [0, 96], sizes = [2, 32], strides = [1, 1]} : vector<2x128xf32> to vector<2x32xf32>
    %286 = arith.mulf %283, %249 : vector<2x32xf32>
    %287 = arith.mulf %282, %284 : vector<2x32xf32>
    %288 = arith.addf %286, %287 : vector<2x32xf32>
    %289 = math.tanh %288 : vector<2x32xf32>
    %290 = arith.mulf %285, %289 : vector<2x32xf32>
    %cst_56 = arith.constant dense<0.000000e+00> : vector<2x128xf32>
    %291 = tpu.matmul %290, %1, %cst_56 {dimension_numbers = #tpu.dot_dimension_numbers<[1], [0], [0], [1], [0, 0, 1, 1], [], []>} : vector<2x32xf32>, vector<32x128xf32>, vector<2x128xf32> -> vector<2x128xf32>
    %292 = vector.broadcast %5 : vector<1x128xf32> to vector<2x128xf32>
    %293 = arith.addf %291, %292 : vector<2x128xf32>
    %cst_57 = arith.constant dense<0.000000e+00> : vector<2x128xf32>
    %294 = tpu.matmul %271, %3, %cst_57 {dimension_numbers = #tpu.dot_dimension_numbers<[1], [0], [0], [1], [0, 0, 1, 1], [], []>} : vector<2x32xf32>, vector<32x128xf32>, vector<2x128xf32> -> vector<2x128xf32>
    %295 = arith.addf %293, %294 : vector<2x128xf32>
    %296 = arith.negf %295 : vector<2x128xf32>
    %297 = math.exp %296 : vector<2x128xf32>
    %cst_58 = arith.constant 1.000000e+00 : f32
    %298 = vector.broadcast %cst_58 : f32 to vector<2x128xf32>
    %299 = arith.addf %298, %297 : vector<2x128xf32>
    %300 = arith.divf %298, %299 : vector<2x128xf32>
    %301 = math.tanh %295 : vector<2x128xf32>
    %302 = vector.extract_strided_slice %300 {offsets = [0, 0], sizes = [2, 32], strides = [1, 1]} : vector<2x128xf32> to vector<2x32xf32>
    %303 = vector.extract_strided_slice %300 {offsets = [0, 32], sizes = [2, 32], strides = [1, 1]} : vector<2x128xf32> to vector<2x32xf32>
    %304 = vector.extract_strided_slice %301 {offsets = [0, 64], sizes = [2, 32], strides = [1, 1]} : vector<2x128xf32> to vector<2x32xf32>
    %305 = vector.extract_strided_slice %300 {offsets = [0, 96], sizes = [2, 32], strides = [1, 1]} : vector<2x128xf32> to vector<2x32xf32>
    %306 = arith.mulf %303, %269 : vector<2x32xf32>
    %307 = arith.mulf %302, %304 : vector<2x32xf32>
    %308 = arith.addf %306, %307 : vector<2x32xf32>
    %309 = math.tanh %308 : vector<2x32xf32>
    %310 = arith.mulf %305, %309 : vector<2x32xf32>
    %c14 = arith.constant 14 : index
    %c0_59 = arith.constant 0 : index
    %311 = vector.load %arg7[%c14, %c0_59] : memref<16x32xf32, #tpu.memory_space<vmem>>, vector<2x32xf32>
    tpu.vector_store %arg7[%c14, %c0_59], %310 {strides = array<i32>} : memref<16x32xf32, #tpu.memory_space<vmem>>, vector<2x32xf32>,
    return
  }
}

</mosaic_0001>

<llo_original>
// kernel: _fused_lstm_forward_impl.1
$region0: #{_fused_lstm_forward_impl.1}
  #allocation0 [shape = 'u32[]', space=smem, size = 0x4, offset = 0x4, fixed_abs, tag = 'smem constant byte address 0x4 - core index']
  #allocation1 [shape = 'u32[144,128]{1,0:T(1,128)}', space=vmem, size = 0x12000, scoped, tag = 'internal scratch']
  %s0 = inlined_call_operand.vmem [shape: f32[16,16], index: 0, kind: input, shape index: {}]
  %s1 = inlined_call_operand.hbm [shape: f32[16,128], index: 1, kind: input, shape index: {}]
  %s2 = inlined_call_operand.vmem [shape: f32[32,128], index: 2, kind: input, shape index: {}]
  %s3 = inlined_call_operand.vmem [shape: f32[1,128], index: 3, kind: input, shape index: {}]
  %s4 = inlined_call_operand.hbm [shape: f32[32,128], index: 4, kind: input, shape index: {}]
  %s5 = inlined_call_operand.hbm [shape: f32[32,128], index: 5, kind: input, shape index: {}]
  %s6 = inlined_call_operand.vmem [shape: f32[1,128], index: 6, kind: input, shape index: {}]
  %s7 = inlined_call_operand.vmem [shape: f32[16,32], index: 7, kind: output, shape index: {}]
  %s8 = sld [smem:[#allocation0]]
  $region50: #{_fused_lstm_forward_impl.1} parent=0
    _
  %s10 = ssub.s32 1, %s8
  %s11 = scalar_select 0, %s10, %s8
  $region1: #{_fused_lstm_forward_impl.1} parent=0
    #allocation2 [shape = 'u8[8192]{0}', space=vmem, size = 0x2000, scoped, tag = 'input window, operand 1, single buffered']
    #allocation3 [shape = 's32[1]{0}', space=sflag, size = 0x4, scoped, tag = 'scoped memory for _fused_lstm_forward_impl.1']
    #allocation4 [shape = 'u8[16384]{0}', space=vmem, size = 0x4000, scoped, tag = 'input window, operand 4, single buffered']
    #allocation5 [shape = 's32[1]{0}', space=sflag, size = 0x4, scoped, tag = 'scoped memory for _fused_lstm_forward_impl.1']
    #allocation6 [shape = 'u8[16384]{0}', space=vmem, size = 0x4000, scoped, tag = 'input window, operand 5, single buffered']
    %12 = vsyncpa [#allocation3], 0
    %13 = vsyncpa [#allocation5], 0
    // Predicated region
    $region2: #{_fused_lstm_forward_impl.1} parent=1 // pred_check
      _
    $region3: #{_fused_lstm_forward_impl.1} parent=1 // pred_check_branch
      %15 = sbr.rel (0) target = $region5
    $region4: #{_fused_lstm_forward_impl.1} parent=1 // pred_region
      _
    $region5: #{_fused_lstm_forward_impl.1} parent=1 // pred_fallthru
      _
    // Predicated region
    $region6: #{_fused_lstm_forward_impl.1} parent=1 // pred_check
      _
    $region7: #{_fused_lstm_forward_impl.1} parent=1 // pred_check_branch
      %17 = sbr.rel (0) target = $region9
    $region8: #{_fused_lstm_forward_impl.1} parent=1 // pred_region
      %s19 = ssub.s32 256, 256
      %20 = vsyncadd [#allocation3], %s19
      %s21 = sshll.u32 [#allocation2], 4
      %s22 = int_to_ptr.vmem [resolvable:$true] %s21
      %27 = dma.hbm_to_vmem [thread:$0]  %s1, 256, %s22, [#allocation3], 128, 128, 8
    $region9: #{_fused_lstm_forward_impl.1} parent=1 // pred_fallthru
      _
    // Predicated region
    $region10: #{_fused_lstm_forward_impl.1} parent=1 // pred_check
      _
    $region11: #{_fused_lstm_forward_impl.1} parent=1 // pred_check_branch
      %29 = sbr.rel (0) target = $region13
    $region12: #{_fused_lstm_forward_impl.1} parent=1 // pred_region
      _
    $region13: #{_fused_lstm_forward_impl.1} parent=1 // pred_fallthru
      _
    // Predicated region
    $region14: #{_fused_lstm_forward_impl.1} parent=1 // pred_check
      _
    $region15: #{_fused_lstm_forward_impl.1} parent=1 // pred_check_branch
      %31 = sbr.rel (0) target = $region17
    $region16: #{_fused_lstm_forward_impl.1} parent=1 // pred_region
      _
    $region17: #{_fused_lstm_forward_impl.1} parent=1 // pred_fallthru
      _
    // Predicated region
    $region18: #{_fused_lstm_forward_impl.1} parent=1 // pred_check
      _
    $region19: #{_fused_lstm_forward_impl.1} parent=1 // pred_check_branch
      %33 = sbr.rel (0) target = $region21
    $region20: #{_fused_lstm_forward_impl.1} parent=1 // pred_region
      %s35 = ssub.s32 512, 512
      %36 = vsyncadd [#allocation5], %s35
      %s37 = sshll.u32 [#allocation4], 4
      %s38 = int_to_ptr.vmem [resolvable:$true] %s37
      %43 = dma.hbm_to_vmem [thread:$0]  %s4, 512, %s38, [#allocation5], 128, 128, 8
    $region21: #{_fused_lstm_forward_impl.1} parent=1 // pred_fallthru
      _
    // Predicated region
    $region22: #{_fused_lstm_forward_impl.1} parent=1 // pred_check
      _
    $region23: #{_fused_lstm_forward_impl.1} parent=1 // pred_check_branch
      %45 = sbr.rel (0) target = $region25
    $region24: #{_fused_lstm_forward_impl.1} parent=1 // pred_region
      %s47 = ssub.s32 512, 512
      %48 = vsyncadd [#allocation5], %s47
      %s49 = sshll.u32 [#allocation6], 4
      %s50 = int_to_ptr.vmem [resolvable:$true] %s49
      %55 = dma.hbm_to_vmem [thread:$0]  %s5, 512, %s50, [#allocation5], 128, 128, 8
    $region25: #{_fused_lstm_forward_impl.1} parent=1 // pred_fallthru
      _
    // Predicated region
    $region26: #{_fused_lstm_forward_impl.1} parent=1 // pred_check
      _
    $region27: #{_fused_lstm_forward_impl.1} parent=1 // pred_check_branch
      %57 = sbr.rel (0) target = $region29
    $region28: #{_fused_lstm_forward_impl.1} parent=1 // pred_region
      _
    $region29: #{_fused_lstm_forward_impl.1} parent=1 // pred_fallthru
      _
    // Predicated region
    $region30: #{_fused_lstm_forward_impl.1} parent=1 // pred_check
      _
    $region31: #{_fused_lstm_forward_impl.1} parent=1 // pred_check_branch
      %59 = sbr.rel (0) target = $region33
    $region32: #{_fused_lstm_forward_impl.1} parent=1 // pred_region
      %60 = dma.done [#allocation3], 256
    $region33: #{_fused_lstm_forward_impl.1} parent=1 // pred_fallthru
      _
    // Predicated region
    $region34: #{_fused_lstm_forward_impl.1} parent=1 // pred_check
      _
    $region35: #{_fused_lstm_forward_impl.1} parent=1 // pred_check_branch
      %62 = sbr.rel (0) target = $region37
    $region36: #{_fused_lstm_forward_impl.1} parent=1 // pred_region
      %63 = dma.done [#allocation5], 512
    $region37: #{_fused_lstm_forward_impl.1} parent=1 // pred_fallthru
      _
    // Predicated region
    $region38: #{_fused_lstm_forward_impl.1} parent=1 // pred_check
      _
    $region39: #{_fused_lstm_forward_impl.1} parent=1 // pred_check_branch
      %65 = sbr.rel (0) target = $region41
    $region40: #{_fused_lstm_forward_impl.1} parent=1 // pred_region
      %66 = dma.done [#allocation5], 512
    $region41: #{_fused_lstm_forward_impl.1} parent=1 // pred_fallthru
      _
    %v67 = vld [vmem:[#allocation2] sm:$0xff]
    %v68 = vld [vmem:[#allocation2 + $0x8] sm:$0xff]
    %v69 = vld [vmem:[#allocation4] sm:$0xff]
    %v70 = vld [vmem:[#allocation4 + $0x8] sm:$0xff]
    %v71 = vld [vmem:[#allocation4 + $0x10] sm:$0xff]
    %v72 = vld [vmem:[#allocation4 + $0x18] sm:$0xff]
    %v73 = vld [vmem:[%s2] sm:$0xff]
    %v74 = vld [vmem:[%s2 + $0x8] sm:$0xff]
    %v75 = vld [vmem:[%s2 + $0x10] sm:$0xff]
    %v76 = vld [vmem:[%s2 + $0x18] sm:$0xff]
    %v77 = vld [vmem:[#allocation6] sm:$0xff]
    %v78 = vld [vmem:[#allocation6 + $0x8] sm:$0xff]
    %v79 = vld [vmem:[#allocation6 + $0x10] sm:$0xff]
    %v80 = vld [vmem:[#allocation6 + $0x18] sm:$0xff]
    %v81 = vld [vmem:[%s3] sm:$0x1]
    %v82 = vld [vmem:[%s6] sm:$0x1]
    %v83 = vld [vmem:[%s0] sm:$0xff]
    %v84 = vld [vmem:[%s0 + $0x8] sm:$0xff]
    %v86 = vlaneseq
    %v87 = vshrl.u32 %v86, 7
    %v88 = vsub.s32 0, %v87
    %v89 = vrot.slane %v81, %v88
    %vm91 = vcmask 130048
    %v93 = vsel %vm91, %v83, 0
    %v96 = vsel %vm91, %v84, 0
    %98 = vmatprep.subr.mxu0 0.0
    %99 = vmatpush1.msra.mxu0 %v67
    %100 = vmatprep.subr.mxu0 0.0
    %101 = vmatpush1.msra.mxu0 %v68
    %102 = vmatprep.subr.mxu0 0.0
    %103 = vmatpush1.msra.mxu0 0.0
    %104 = vmatprep.subr.mxu0 0.0
    %105 = vmatpush1.msra.mxu0 0.0
    %106 = vmatprep.subr.mxu0 0.0
    %107 = vmatpush1.msra.mxu0 0.0
    %108 = vmatprep.subr.mxu0 0.0
    %109 = vmatpush1.msra.mxu0 0.0
    %110 = vmatprep.subr.mxu0 0.0
    %111 = vmatpush1.msra.mxu0 0.0
    %112 = vmatprep.subr.mxu0 0.0
    %113 = vmatpush1.msra.mxu0 0.0
    %114 = vmatprep.subr.mxu0 0.0
    %115 = vmatpush1.msra.mxu0 0.0
    %116 = vmatprep.subr.mxu0 0.0
    %117 = vmatpush1.msra.mxu0 0.0
    %118 = vmatprep.subr.mxu0 0.0
    %119 = vmatpush1.msra.mxu0 0.0
    %120 = vmatprep.subr.mxu0 0.0
    %121 = vmatpush1.msra.mxu0 0.0
    %122 = vmatprep.subr.mxu0 0.0
    %123 = vmatpush1.msra.mxu0 0.0
    %124 = vmatprep.subr.mxu0 0.0
    %125 = vmatpush1.msra.mxu0 0.0
    %126 = vmatprep.subr.mxu0 0.0
    %127 = vmatpush1.msra.mxu0 0.0
    %128 = vmatprep.subr.mxu0 0.0
    %129 = vmatpush1.msra.mxu0 0.0
    %130 = vmatprep.subr.mxu0 0.0
    %131 = vmatpush1.msra.mxu0 0.0
    %132 = vmatprep.subr.mxu0 0.0
    %133 = vmatpush1.msra.mxu0 0.0
    %134 = vmatprep.subr.mxu0 0.0
    %135 = vmatpush1.msra.mxu0 0.0
    %136 = vmatprep.subr.mxu0 0.0
    %137 = vmatpush1.msra.mxu0 0.0
    %138 = vmatprep.subr.mxu0 0.0
    %139 = vmatpush1.msra.mxu0 0.0
    %140 = vmatprep.subr.mxu0 0.0
    %141 = vmatpush1.msra.mxu0 0.0
    %142 = vmatprep.subr.mxu0 0.0
    %143 = vmatpush1.msra.mxu0 0.0
    %144 = vmatprep.subr.mxu0 0.0
    %145 = vmatpush1.msra.mxu0 0.0
    %146 = vmatprep.subr.mxu0 0.0
    %147 = vmatpush1.msra.mxu0 0.0
    %148 = vmatprep.subr.mxu0 0.0
    %149 = vmatpush1.msra.mxu0 0.0
    %150 = vmatprep.subr.mxu0 0.0
    %151 = vmatpush1.msra.mxu0 0.0
    %152 = vmatprep.subr.mxu0 0.0
    %153 = vmatpush1.msra.mxu0 0.0
    %154 = vmatprep.subr.mxu0 0.0
    %155 = vmatpush1.msra.mxu0 0.0
    %156 = vmatprep.subr.mxu0 0.0
    %157 = vmatpush1.msra.mxu0 0.0
    %158 = vmatprep.subr.mxu0 0.0
    %159 = vmatpush1.msra.mxu0 0.0
    %160 = vmatprep.subr.mxu0 0.0
    %161 = vmatpush1.msra.mxu0 0.0
    %162 = vmatprep.mubr.f32.mxu0 0.0
    %163 = vmatmul.mubr.f32.gmra.mrb[0].mxu0 %v93
    %v164 = vpop.f32.mrb[0].mxu0
    %v165 = vadd.f32 %v89, %v164
    %v166 = vpop.f32.mrb[0].mxu0
    %167 = vmatprep.mubr.f32.mxu0 0.0
    %168 = vmatmul.mubr.f32.gmra.mrb[0].mxu0 %v96
    %v169 = vpop.f32.mrb[0].mxu0
    %v170 = vadd.f32 %v89, %v169
    %v171 = vpop.f32.mrb[0].mxu0
    %172 = vdwg.mxu0
    %v173 = vxor.u32 %v165, 2147483648
    %v174 = vmul.f32 %v173, 1.442695
    %v175 = vpow.pop %v174
    %v176 = vadd.f32 %v175, 1.0
    %v177 = vrcp.pop %v176
    %v178 = vmul.f32 1.0, %v177
    %v179 = vtanh.pop %v165
    %181 = vrot.lane.b32.xlu0 %v179, 64
    %v182 = vpop.permute.xlu0 %181
    %v184 = vmul.f32 %v178, %v182
    %v185 = vtanh.pop %v184
    %187 = vrot.lane.b32.xlu0 %v185, 96
    %v188 = vpop.permute.xlu0 %187
    %v190 = vmul.f32 %v178, %v188
    %v192 = vlaneseq
    %v193 = vshrl.u32 %v192, 7
    %v194 = vsub.s32 0, %v193
    %v195 = vrot.slane %v82, %v194
    %198 = vrot.lane.b32.xlu0 %v190, 32
    %v199 = vpop.permute.xlu0 %198
    %vm200 = vcmask 261120
    %v201 = vsel %vm200, %v199, 0
    %203 = vmatprep.subr.mxu0 0.0
    %204 = vmatpush1.msra.mxu0 %v69
    %205 = vmatprep.subr.mxu0 0.0
    %206 = vmatpush1.msra.mxu0 %v70
    %207 = vmatprep.subr.mxu0 0.0
    %208 = vmatpush1.msra.mxu0 %v71
    %209 = vmatprep.subr.mxu0 0.0
    %210 = vmatpush1.msra.mxu0 %v72
    %211 = vmatprep.subr.mxu0 0.0
    %212 = vmatpush1.msra.mxu0 0.0
    %213 = vmatprep.subr.mxu0 0.0
    %214 = vmatpush1.msra.mxu0 0.0
    %215 = vmatprep.subr.mxu0 0.0
    %216 = vmatpush1.msra.mxu0 0.0
    %217 = vmatprep.subr.mxu0 0.0
    %218 = vmatpush1.msra.mxu0 0.0
    %219 = vmatprep.subr.mxu0 0.0
    %220 = vmatpush1.msra.mxu0 0.0
    %221 = vmatprep.subr.mxu0 0.0
    %222 = vmatpush1.msra.mxu0 0.0
    %223 = vmatprep.subr.mxu0 0.0
    %224 = vmatpush1.msra.mxu0 0.0
    %225 = vmatprep.subr.mxu0 0.0
    %226 = vmatpush1.msra.mxu0 0.0
    %227 = vmatprep.subr.mxu0 0.0
    %228 = vmatpush1.msra.mxu0 0.0
    %229 = vmatprep.subr.mxu0 0.0
    %230 = vmatpush1.msra.mxu0 0.0
    %231 = vmatprep.subr.mxu0 0.0
    %232 = vmatpush1.msra.mxu0 0.0
    %233 = vmatprep.subr.mxu0 0.0
    %234 = vmatpush1.msra.mxu0 0.0
    %235 = vmatprep.subr.mxu0 0.0
    %236 = vmatpush1.msra.mxu0 0.0
    %237 = vmatprep.subr.mxu0 0.0
    %238 = vmatpush1.msra.mxu0 0.0
    %239 = vmatprep.subr.mxu0 0.0
    %240 = vmatpush1.msra.mxu0 0.0
    %241 = vmatprep.subr.mxu0 0.0
    %242 = vmatpush1.msra.mxu0 0.0
    %243 = vmatprep.subr.mxu0 0.0
    %244 = vmatpush1.msra.mxu0 0.0
    %245 = vmatprep.subr.mxu0 0.0
    %246 = vmatpush1.msra.mxu0 0.0
    %247 = vmatprep.subr.mxu0 0.0
    %248 = vmatpush1.msra.mxu0 0.0
    %249 = vmatprep.subr.mxu0 0.0
    %250 = vmatpush1.msra.mxu0 0.0
    %251 = vmatprep.subr.mxu0 0.0
    %252 = vmatpush1.msra.mxu0 0.0
    %253 = vmatprep.subr.mxu0 0.0
    %254 = vmatpush1.msra.mxu0 0.0
    %255 = vmatprep.subr.mxu0 0.0
    %256 = vmatpush1.msra.mxu0 0.0
    %257 = vmatprep.subr.mxu0 0.0
    %258 = vmatpush1.msra.mxu0 0.0
    %259 = vmatprep.subr.mxu0 0.0
    %260 = vmatpush1.msra.mxu0 0.0
    %261 = vmatprep.subr.mxu0 0.0
    %262 = vmatpush1.msra.mxu0 0.0
    %263 = vmatprep.subr.mxu0 0.0
    %264 = vmatpush1.msra.mxu0 0.0
    %265 = vmatprep.subr.mxu0 0.0
    %266 = vmatpush1.msra.mxu0 0.0
    %267 = vmatprep.mubr.f32.mxu0 0.0
    %268 = vmatmul.mubr.f32.gmra.mrb[0].mxu0 %v201
    %v269 = vpop.f32.mrb[0].mxu0
    %v270 = vadd.f32 %v195, %v269
    %v271 = vpop.f32.mrb[0].mxu0
    %272 = vdwg.mxu0
    %v273 = vxor.u32 %v270, 2147483648
    %v274 = vmul.f32 %v273, 1.442695
    %v275 = vpow.pop %v274
    %v276 = vadd.f32 %v275, 1.0
    %v277 = vrcp.pop %v276
    %v278 = vmul.f32 1.0, %v277
    %v279 = vtanh.pop %v270
    %281 = vrot.lane.b32.xlu0 %v279, 64
    %v282 = vpop.permute.xlu0 %281
    %v284 = vmul.f32 %v278, %v282
    %v285 = vtanh.pop %v284
    %287 = vrot.lane.b32.xlu0 %v285, 96
    %v288 = vpop.permute.xlu0 %287
    %v290 = vmul.f32 %v278, %v288
    %292 = vrot.lane.b32.xlu0 %v290, 32
    %v293 = vpop.permute.xlu0 %292
    %vm295 = vcmask 254976
    %296 = vst.msk [vmem:[%s7] sm:$0x3] %vm295, %v293
    %297 = vmatprep.subr.mxu0 0.0
    %298 = vmatpush1.msra.mxu0 %v73
    %299 = vmatprep.subr.mxu0 0.0
    %300 = vmatpush1.msra.mxu0 %v74
    %301 = vmatprep.subr.mxu0 0.0
    %302 = vmatpush1.msra.mxu0 %v75
    %303 = vmatprep.subr.mxu0 0.0
    %304 = vmatpush1.msra.mxu0 %v76
    %305 = vmatprep.subr.mxu0 0.0
    %306 = vmatpush1.msra.mxu0 0.0
    %307 = vmatprep.subr.mxu0 0.0
    %308 = vmatpush1.msra.mxu0 0.0
    %309 = vmatprep.subr.mxu0 0.0
    %310 = vmatpush1.msra.mxu0 0.0
    %311 = vmatprep.subr.mxu0 0.0
    %312 = vmatpush1.msra.mxu0 0.0
    %313 = vmatprep.subr.mxu0 0.0
    %314 = vmatpush1.msra.mxu0 0.0
    %315 = vmatprep.subr.mxu0 0.0
    %316 = vmatpush1.msra.mxu0 0.0
    %317 = vmatprep.subr.mxu0 0.0
    %318 = vmatpush1.msra.mxu0 0.0
    %319 = vmatprep.subr.mxu0 0.0
    %320 = vmatpush1.msra.mxu0 0.0
    %321 = vmatprep.subr.mxu0 0.0
    %322 = vmatpush1.msra.mxu0 0.0
    %323 = vmatprep.subr.mxu0 0.0
    %324 = vmatpush1.msra.mxu0 0.0
    %325 = vmatprep.subr.mxu0 0.0
    %326 = vmatpush1.msra.mxu0 0.0
    %327 = vmatprep.subr.mxu0 0.0
    %328 = vmatpush1.msra.mxu0 0.0
    %329 = vmatprep.subr.mxu0 0.0
    %330 = vmatpush1.msra.mxu0 0.0
    %331 = vmatprep.subr.mxu0 0.0
    %332 = vmatpush1.msra.mxu0 0.0
    %333 = vmatprep.subr.mxu0 0.0
    %334 = vmatpush1.msra.mxu0 0.0
    %335 = vmatprep.subr.mxu0 0.0
    %336 = vmatpush1.msra.mxu0 0.0
    %337 = vmatprep.subr.mxu0 0.0
    %338 = vmatpush1.msra.mxu0 0.0
    %339 = vmatprep.subr.mxu0 0.0
    %340 = vmatpush1.msra.mxu0 0.0
    %341 = vmatprep.subr.mxu0 0.0
    %342 = vmatpush1.msra.mxu0 0.0
    %343 = vmatprep.subr.mxu0 0.0
    %344 = vmatpush1.msra.mxu0 0.0
    %345 = vmatprep.subr.mxu0 0.0
    %346 = vmatpush1.msra.mxu0 0.0
    %347 = vmatprep.subr.mxu0 0.0
    %348 = vmatpush1.msra.mxu0 0.0
    %349 = vmatprep.subr.mxu0 0.0
    %350 = vmatpush1.msra.mxu0 0.0
    %351 = vmatprep.subr.mxu0 0.0
    %352 = vmatpush1.msra.mxu0 0.0
    %353 = vmatprep.subr.mxu0 0.0
    %354 = vmatpush1.msra.mxu0 0.0
    %355 = vmatprep.subr.mxu0 0.0
    %356 = vmatpush1.msra.mxu0 0.0
    %357 = vmatprep.subr.mxu0 0.0
    %358 = vmatpush1.msra.mxu0 0.0
    %359 = vmatprep.subr.mxu0 0.0
    %360 = vmatpush1.msra.mxu0 0.0
    %361 = vmatprep.mubr.f32.mxu0 0.0
    %362 = vmatmul.mubr.f32.gmra.mrb[0].mxu0 %v201
    %v363 = vpop.f32.mrb[0].mxu0
    %v364 = vadd.f32 0.0, %v363
    %v365 = vpop.f32.mrb[0].mxu0
    %366 = vdwg.mxu0
    %v368 = vrot.slane %v364, 6
    %v370 = vadd.f32 %v165, %v368
    %v371 = vxor.u32 %v370, 2147483648
    %v372 = vmul.f32 %v371, 1.442695
    %v373 = vpow.pop %v372
    %v374 = vadd.f32 %v373, 1.0
    %v375 = vrcp.pop %v374
    %v376 = vmul.f32 1.0, %v375
    %v377 = vtanh.pop %v370
    %v379 = vrot.slane %v184, 6
    %380 = vrot.lane.b32.xlu0 %v379, 32
    %v381 = vpop.permute.xlu0 %380
    %v383 = vmul.f32 %v376, %v381
    %385 = vrot.lane.b32.xlu0 %v377, 64
    %v386 = vpop.permute.xlu0 %385
    %v388 = vmul.f32 %v376, %v386
    %390 = vrot.lane.b32.xlu0 %v388, 32
    %v391 = vpop.permute.xlu0 %390
    %v393 = vadd.f32 %v383, %v391
    %v394 = vtanh.pop %v393
    %396 = vrot.lane.b32.xlu0 %v394, 64
    %v397 = vpop.permute.xlu0 %396
    %v399 = vmul.f32 %v376, %v397
    %v401 = vrot.slane %v399, 2
    %402 = vrot.lane.b32.xlu0 %v401, 32
    %v403 = vpop.permute.xlu0 %402
    %v404 = vsel %vm200, %v403, 0
    %406 = vmatprep.subr.mxu0 0.0
    %407 = vmatpush1.msra.mxu0 %v69
    %408 = vmatprep.subr.mxu0 0.0
    %409 = vmatpush1.msra.mxu0 %v70
    %410 = vmatprep.subr.mxu0 0.0
    %411 = vmatpush1.msra.mxu0 %v71
    %412 = vmatprep.subr.mxu0 0.0
    %413 = vmatpush1.msra.mxu0 %v72
    %414 = vmatprep.subr.mxu0 0.0
    %415 = vmatpush1.msra.mxu0 0.0
    %416 = vmatprep.subr.mxu0 0.0
    %417 = vmatpush1.msra.mxu0 0.0
    %418 = vmatprep.subr.mxu0 0.0
    %419 = vmatpush1.msra.mxu0 0.0
    %420 = vmatprep.subr.mxu0 0.0
    %421 = vmatpush1.msra.mxu0 0.0
    %422 = vmatprep.subr.mxu0 0.0
    %423 = vmatpush1.msra.mxu0 0.0
    %424 = vmatprep.subr.mxu0 0.0
    %425 = vmatpush1.msra.mxu0 0.0
    %426 = vmatprep.subr.mxu0 0.0
    %427 = vmatpush1.msra.mxu0 0.0
    %428 = vmatprep.subr.mxu0 0.0
    %429 = vmatpush1.msra.mxu0 0.0
    %430 = vmatprep.subr.mxu0 0.0
    %431 = vmatpush1.msra.mxu0 0.0
    %432 = vmatprep.subr.mxu0 0.0
    %433 = vmatpush1.msra.mxu0 0.0
    %434 = vmatprep.subr.mxu0 0.0
    %435 = vmatpush1.msra.mxu0 0.0
    %436 = vmatprep.subr.mxu0 0.0
    %437 = vmatpush1.msra.mxu0 0.0
    %438 = vmatprep.subr.mxu0 0.0
    %439 = vmatpush1.msra.mxu0 0.0
    %440 = vmatprep.subr.mxu0 0.0
    %441 = vmatpush1.msra.mxu0 0.0
    %442 = vmatprep.subr.mxu0 0.0
    %443 = vmatpush1.msra.mxu0 0.0
    %444 = vmatprep.subr.mxu0 0.0
    %445 = vmatpush1.msra.mxu0 0.0
    %446 = vmatprep.subr.mxu0 0.0
    %447 = vmatpush1.msra.mxu0 0.0
    %448 = vmatprep.subr.mxu0 0.0
    %449 = vmatpush1.msra.mxu0 0.0
    %450 = vmatprep.subr.mxu0 0.0
    %451 = vmatpush1.msra.mxu0 0.0
    %452 = vmatprep.subr.mxu0 0.0
    %453 = vmatpush1.msra.mxu0 0.0
    %454 = vmatprep.subr.mxu0 0.0
    %455 = vmatpush1.msra.mxu0 0.0
    %456 = vmatprep.subr.mxu0 0.0
    %457 = vmatpush1.msra.mxu0 0.0
    %458 = vmatprep.subr.mxu0 0.0
    %459 = vmatpush1.msra.mxu0 0.0
    %460 = vmatprep.subr.mxu0 0.0
    %461 = vmatpush1.msra.mxu0 0.0
    %462 = vmatprep.subr.mxu0 0.0
    %463 = vmatpush1.msra.mxu0 0.0
    %464 = vmatprep.subr.mxu0 0.0
    %465 = vmatpush1.msra.mxu0 0.0
    %466 = vmatprep.subr.mxu0 0.0
    %467 = vmatpush1.msra.mxu0 0.0
    %468 = vmatprep.subr.mxu0 0.0
    %469 = vmatpush1.msra.mxu0 0.0
    %470 = vmatprep.mubr.f32.mxu0 0.0
    %471 = vmatmul.mubr.f32.gmra.mrb[0].mxu0 %v404
    %v472 = vpop.f32.mrb[0].mxu0
    %v473 = vadd.f32 %v195, %v472
    %v474 = vpop.f32.mrb[0].mxu0
    %475 = vdwg.mxu0
    %v476 = vsel %vm200, %v293, 0
    %478 = vmatprep.subr.mxu0 0.0
    %479 = vmatpush1.msra.mxu0 %v77
    %480 = vmatprep.subr.mxu0 0.0
    %481 = vmatpush1.msra.mxu0 %v78
    %482 = vmatprep.subr.mxu0 0.0
    %483 = vmatpush1.msra.mxu0 %v79
    %484 = vmatprep.subr.mxu0 0.0
    %485 = vmatpush1.msra.mxu0 %v80
    %486 = vmatprep.subr.mxu0 0.0
    %487 = vmatpush1.msra.mxu0 0.0
    %488 = vmatprep.subr.mxu0 0.0
    %489 = vmatpush1.msra.mxu0 0.0
    %490 = vmatprep.subr.mxu0 0.0
    %491 = vmatpush1.msra.mxu0 0.0
    %492 = vmatprep.subr.mxu0 0.0
    %493 = vmatpush1.msra.mxu0 0.0
    %494 = vmatprep.subr.mxu0 0.0
    %495 = vmatpush1.msra.mxu0 0.0
    %496 = vmatprep.subr.mxu0 0.0
    %497 = vmatpush1.msra.mxu0 0.0
    %498 = vmatprep.subr.mxu0 0.0
    %499 = vmatpush1.msra.mxu0 0.0
    %500 = vmatprep.subr.mxu0 0.0
    %501 = vmatpush1.msra.mxu0 0.0
    %502 = vmatprep.subr.mxu0 0.0
    %503 = vmatpush1.msra.mxu0 0.0
    %504 = vmatprep.subr.mxu0 0.0
    %505 = vmatpush1.msra.mxu0 0.0
    %506 = vmatprep.subr.mxu0 0.0
    %507 = vmatpush1.msra.mxu0 0.0
    %508 = vmatprep.subr.mxu0 0.0
    %509 = vmatpush1.msra.mxu0 0.0
    %510 = vmatprep.subr.mxu0 0.0
    %511 = vmatpush1.msra.mxu0 0.0
    %512 = vmatprep.subr.mxu0 0.0
    %513 = vmatpush1.msra.mxu0 0.0
    %514 = vmatprep.subr.mxu0 0.0
    %515 = vmatpush1.msra.mxu0 0.0
    %516 = vmatprep.subr.mxu0 0.0
    %517 = vmatpush1.msra.mxu0 0.0
    %518 = vmatprep.subr.mxu0 0.0
    %519 = vmatpush1.msra.mxu0 0.0
    %520 = vmatprep.subr.mxu0 0.0
    %521 = vmatpush1.msra.mxu0 0.0
    %522 = vmatprep.subr.mxu0 0.0
    %523 = vmatpush1.msra.mxu0 0.0
    %524 = vmatprep.subr.mxu0 0.0
    %525 = vmatpush1.msra.mxu0 0.0
    %526 = vmatprep.subr.mxu0 0.0
    %527 = vmatpush1.msra.mxu0 0.0
    %528 = vmatprep.subr.mxu0 0.0
    %529 = vmatpush1.msra.mxu0 0.0
    %530 = vmatprep.subr.mxu0 0.0
    %531 = vmatpush1.msra.mxu0 0.0
    %532 = vmatprep.subr.mxu0 0.0
    %533 = vmatpush1.msra.mxu0 0.0
    %534 = vmatprep.subr.mxu0 0.0
    %535 = vmatpush1.msra.mxu0 0.0
    %536 = vmatprep.subr.mxu0 0.0
    %537 = vmatpush1.msra.mxu0 0.0
    %538 = vmatprep.subr.mxu0 0.0
    %539 = vmatpush1.msra.mxu0 0.0
    %540 = vmatprep.subr.mxu0 0.0
    %541 = vmatpush1.msra.mxu0 0.0
    %542 = vmatprep.mubr.f32.mxu0 0.0
    %543 = vmatmul.mubr.f32.gmra.mrb[0].mxu0 %v476
    %v544 = vpop.f32.mrb[0].mxu0
    %v545 = vadd.f32 0.0, %v544
    %v546 = vpop.f32.mrb[0].mxu0
    %547 = vdwg.mxu0
    %v548 = vadd.f32 %v473, %v545
    %v549 = vxor.u32 %v548, 2147483648
    %v550 = vmul.f32 %v549, 1.442695
    %v551 = vpow.pop %v550
    %v552 = vadd.f32 %v551, 1.0
    %v553 = vrcp.pop %v552
    %v554 = vmul.f32 1.0, %v553
    %v555 = vtanh.pop %v548
    %557 = vrot.lane.b32.xlu0 %v284, 32
    %v558 = vpop.permute.xlu0 %557
    %v560 = vmul.f32 %v554, %v558
    %562 = vrot.lane.b32.xlu0 %v555, 64
    %v563 = vpop.permute.xlu0 %562
    %v565 = vmul.f32 %v554, %v563
    %567 = vrot.lane.b32.xlu0 %v565, 32
    %v568 = vpop.permute.xlu0 %567
    %v570 = vadd.f32 %v560, %v568
    %v571 = vtanh.pop %v570
    %573 = vrot.lane.b32.xlu0 %v571, 64
    %v574 = vpop.permute.xlu0 %573
    %v576 = vmul.f32 %v554, %v574
    %578 = vrot.lane.b32.xlu0 %v576, 32
    %v579 = vpop.permute.xlu0 %578
    %581 = vst.msk [vmem:[%s7 + $0x2] sm:$0x3] %vm295, %v579
    %582 = vmatprep.subr.mxu0 0.0
    %583 = vmatpush1.msra.mxu0 %v73
    %584 = vmatprep.subr.mxu0 0.0
    %585 = vmatpush1.msra.mxu0 %v74
    %586 = vmatprep.subr.mxu0 0.0
    %587 = vmatpush1.msra.mxu0 %v75
    %588 = vmatprep.subr.mxu0 0.0
    %589 = vmatpush1.msra.mxu0 %v76
    %590 = vmatprep.subr.mxu0 0.0
    %591 = vmatpush1.msra.mxu0 0.0
    %592 = vmatprep.subr.mxu0 0.0
    %593 = vmatpush1.msra.mxu0 0.0
    %594 = vmatprep.subr.mxu0 0.0
    %595 = vmatpush1.msra.mxu0 0.0
    %596 = vmatprep.subr.mxu0 0.0
    %597 = vmatpush1.msra.mxu0 0.0
    %598 = vmatprep.subr.mxu0 0.0
    %599 = vmatpush1.msra.mxu0 0.0
    %600 = vmatprep.subr.mxu0 0.0
    %601 = vmatpush1.msra.mxu0 0.0
    %602 = vmatprep.subr.mxu0 0.0
    %603 = vmatpush1.msra.mxu0 0.0
    %604 = vmatprep.subr.mxu0 0.0
    %605 = vmatpush1.msra.mxu0 0.0
    %606 = vmatprep.subr.mxu0 0.0
    %607 = vmatpush1.msra.mxu0 0.0
    %608 = vmatprep.subr.mxu0 0.0
    %609 = vmatpush1.msra.mxu0 0.0
    %610 = vmatprep.subr.mxu0 0.0
    %611 = vmatpush1.msra.mxu0 0.0
    %612 = vmatprep.subr.mxu0 0.0
    %613 = vmatpush1.msra.mxu0 0.0
    %614 = vmatprep.subr.mxu0 0.0
    %615 = vmatpush1.msra.mxu0 0.0
    %616 = vmatprep.subr.mxu0 0.0
    %617 = vmatpush1.msra.mxu0 0.0
    %618 = vmatprep.subr.mxu0 0.0
    %619 = vmatpush1.msra.mxu0 0.0
    %620 = vmatprep.subr.mxu0 0.0
    %621 = vmatpush1.msra.mxu0 0.0
    %622 = vmatprep.subr.mxu0 0.0
    %623 = vmatpush1.msra.mxu0 0.0
    %624 = vmatprep.subr.mxu0 0.0
    %625 = vmatpush1.msra.mxu0 0.0
    %626 = vmatprep.subr.mxu0 0.0
    %627 = vmatpush1.msra.mxu0 0.0
    %628 = vmatprep.subr.mxu0 0.0
    %629 = vmatpush1.msra.mxu0 0.0
    %630 = vmatprep.subr.mxu0 0.0
    %631 = vmatpush1.msra.mxu0 0.0
    %632 = vmatprep.subr.mxu0 0.0
    %633 = vmatpush1.msra.mxu0 0.0
    %634 = vmatprep.subr.mxu0 0.0
    %635 = vmatpush1.msra.mxu0 0.0
    %636 = vmatprep.subr.mxu0 0.0
    %637 = vmatpush1.msra.mxu0 0.0
    %638 = vmatprep.subr.mxu0 0.0
    %639 = vmatpush1.msra.mxu0 0.0
    %640 = vmatprep.subr.mxu0 0.0
    %641 = vmatpush1.msra.mxu0 0.0
    %642 = vmatprep.subr.mxu0 0.0
    %643 = vmatpush1.msra.mxu0 0.0
    %644 = vmatprep.subr.mxu0 0.0
    %645 = vmatpush1.msra.mxu0 0.0
    %646 = vmatprep.mubr.f32.mxu0 0.0
    %647 = vmatmul.mubr.f32.gmra.mrb[0].mxu0 %v404
    %v648 = vpop.f32.mrb[0].mxu0
    %v649 = vadd.f32 0.0, %v648
    %v650 = vpop.f32.mrb[0].mxu0
    %651 = vdwg.mxu0
    %v653 = vrot.slane %v649, 4
    %v655 = vadd.f32 %v165, %v653
    %v656 = vxor.u32 %v655, 2147483648
    %v657 = vmul.f32 %v656, 1.442695
    %v658 = vpow.pop %v657
    %v659 = vadd.f32 %v658, 1.0
    %v660 = vrcp.pop %v659
    %v661 = vmul.f32 1.0, %v660
    %v662 = vtanh.pop %v655
    %v664 = vrot.slane %v393, 6
    %v666 = vmul.f32 %v661, %v664
    %668 = vrot.lane.b32.xlu0 %v662, 64
    %v669 = vpop.permute.xlu0 %668
    %v671 = vmul.f32 %v661, %v669
    %673 = vrot.lane.b32.xlu0 %v671, 32
    %v674 = vpop.permute.xlu0 %673
    %v676 = vadd.f32 %v666, %v674
    %v677 = vtanh.pop %v676
    %679 = vrot.lane.b32.xlu0 %v677, 64
    %v680 = vpop.permute.xlu0 %679
    %v682 = vmul.f32 %v661, %v680
    %v684 = vrot.slane %v682, 4
    %685 = vrot.lane.b32.xlu0 %v684, 32
    %v686 = vpop.permute.xlu0 %685
    %v687 = vsel %vm200, %v686, 0
    %689 = vmatprep.subr.mxu0 0.0
    %690 = vmatpush1.msra.mxu0 %v69
    %691 = vmatprep.subr.mxu0 0.0
    %692 = vmatpush1.msra.mxu0 %v70
    %693 = vmatprep.subr.mxu0 0.0
    %694 = vmatpush1.msra.mxu0 %v71
    %695 = vmatprep.subr.mxu0 0.0
    %696 = vmatpush1.msra.mxu0 %v72
    %697 = vmatprep.subr.mxu0 0.0
    %698 = vmatpush1.msra.mxu0 0.0
    %699 = vmatprep.subr.mxu0 0.0
    %700 = vmatpush1.msra.mxu0 0.0
    %701 = vmatprep.subr.mxu0 0.0
    %702 = vmatpush1.msra.mxu0 0.0
    %703 = vmatprep.subr.mxu0 0.0
    %704 = vmatpush1.msra.mxu0 0.0
    %705 = vmatprep.subr.mxu0 0.0
    %706 = vmatpush1.msra.mxu0 0.0
    %707 = vmatprep.subr.mxu0 0.0
    %708 = vmatpush1.msra.mxu0 0.0
    %709 = vmatprep.subr.mxu0 0.0
    %710 = vmatpush1.msra.mxu0 0.0
    %711 = vmatprep.subr.mxu0 0.0
    %712 = vmatpush1.msra.mxu0 0.0
    %713 = vmatprep.subr.mxu0 0.0
    %714 = vmatpush1.msra.mxu0 0.0
    %715 = vmatprep.subr.mxu0 0.0
    %716 = vmatpush1.msra.mxu0 0.0
    %717 = vmatprep.subr.mxu0 0.0
    %718 = vmatpush1.msra.mxu0 0.0
    %719 = vmatprep.subr.mxu0 0.0
    %720 = vmatpush1.msra.mxu0 0.0
    %721 = vmatprep.subr.mxu0 0.0
    %722 = vmatpush1.msra.mxu0 0.0
    %723 = vmatprep.subr.mxu0 0.0
    %724 = vmatpush1.msra.mxu0 0.0
    %725 = vmatprep.subr.mxu0 0.0
    %726 = vmatpush1.msra.mxu0 0.0
    %727 = vmatprep.subr.mxu0 0.0
    %728 = vmatpush1.msra.mxu0 0.0
    %729 = vmatprep.subr.mxu0 0.0
    %730 = vmatpush1.msra.mxu0 0.0
    %731 = vmatprep.subr.mxu0 0.0
    %732 = vmatpush1.msra.mxu0 0.0
    %733 = vmatprep.subr.mxu0 0.0
    %734 = vmatpush1.msra.mxu0 0.0
    %735 = vmatprep.subr.mxu0 0.0
    %736 = vmatpush1.msra.mxu0 0.0
    %737 = vmatprep.subr.mxu0 0.0
    %738 = vmatpush1.msra.mxu0 0.0
    %739 = vmatprep.subr.mxu0 0.0
    %740 = vmatpush1.msra.mxu0 0.0
    %741 = vmatprep.subr.mxu0 0.0
    %742 = vmatpush1.msra.mxu0 0.0
    %743 = vmatprep.subr.mxu0 0.0
    %744 = vmatpush1.msra.mxu0 0.0
    %745 = vmatprep.subr.mxu0 0.0
    %746 = vmatpush1.msra.mxu0 0.0
    %747 = vmatprep.subr.mxu0 0.0
    %748 = vmatpush1.msra.mxu0 0.0
    %749 = vmatprep.subr.mxu0 0.0
    %750 = vmatpush1.msra.mxu0 0.0
    %751 = vmatprep.subr.mxu0 0.0
    %752 = vmatpush1.msra.mxu0 0.0
    %753 = vmatprep.mubr.f32.mxu0 0.0
    %754 = vmatmul.mubr.f32.gmra.mrb[0].mxu0 %v687
    %v755 = vpop.f32.mrb[0].mxu0
    %v756 = vadd.f32 %v195, %v755
    %v757 = vpop.f32.mrb[0].mxu0
    %758 = vdwg.mxu0
    %v759 = vsel %vm200, %v579, 0
    %761 = vmatprep.subr.mxu0 0.0
    %762 = vmatpush1.msra.mxu0 %v77
    %763 = vmatprep.subr.mxu0 0.0
    %764 = vmatpush1.msra.mxu0 %v78
    %765 = vmatprep.subr.mxu0 0.0
    %766 = vmatpush1.msra.mxu0 %v79
    %767 = vmatprep.subr.mxu0 0.0
    %768 = vmatpush1.msra.mxu0 %v80
    %769 = vmatprep.subr.mxu0 0.0
    %770 = vmatpush1.msra.mxu0 0.0
    %771 = vmatprep.subr.mxu0 0.0
    %772 = vmatpush1.msra.mxu0 0.0
    %773 = vmatprep.subr.mxu0 0.0
    %774 = vmatpush1.msra.mxu0 0.0
    %775 = vmatprep.subr.mxu0 0.0
    %776 = vmatpush1.msra.mxu0 0.0
    %777 = vmatprep.subr.mxu0 0.0
    %778 = vmatpush1.msra.mxu0 0.0
    %779 = vmatprep.subr.mxu0 0.0
    %780 = vmatpush1.msra.mxu0 0.0
    %781 = vmatprep.subr.mxu0 0.0
    %782 = vmatpush1.msra.mxu0 0.0
    %783 = vmatprep.subr.mxu0 0.0
    %784 = vmatpush1.msra.mxu0 0.0
    %785 = vmatprep.subr.mxu0 0.0
    %786 = vmatpush1.msra.mxu0 0.0
    %787 = vmatprep.subr.mxu0 0.0
    %788 = vmatpush1.msra.mxu0 0.0
    %789 = vmatprep.subr.mxu0 0.0
    %790 = vmatpush1.msra.mxu0 0.0
    %791 = vmatprep.subr.mxu0 0.0
    %792 = vmatpush1.msra.mxu0 0.0
    %793 = vmatprep.subr.mxu0 0.0
    %794 = vmatpush1.msra.mxu0 0.0
    %795 = vmatprep.subr.mxu0 0.0
    %796 = vmatpush1.msra.mxu0 0.0
    %797 = vmatprep.subr.mxu0 0.0
    %798 = vmatpush1.msra.mxu0 0.0
    %799 = vmatprep.subr.mxu0 0.0
    %800 = vmatpush1.msra.mxu0 0.0
    %801 = vmatprep.subr.mxu0 0.0
    %802 = vmatpush1.msra.mxu0 0.0
    %803 = vmatprep.subr.mxu0 0.0
    %804 = vmatpush1.msra.mxu0 0.0
    %805 = vmatprep.subr.mxu0 0.0
    %806 = vmatpush1.msra.mxu0 0.0
    %807 = vmatprep.subr.mxu0 0.0
    %808 = vmatpush1.msra.mxu0 0.0
    %809 = vmatprep.subr.mxu0 0.0
    %810 = vmatpush1.msra.mxu0 0.0
    %811 = vmatprep.subr.mxu0 0.0
    %812 = vmatpush1.msra.mxu0 0.0
    %813 = vmatprep.subr.mxu0 0.0
    %814 = vmatpush1.msra.mxu0 0.0
    %815 = vmatprep.subr.mxu0 0.0
    %816 = vmatpush1.msra.mxu0 0.0
    %817 = vmatprep.subr.mxu0 0.0
    %818 = vmatpush1.msra.mxu0 0.0
    %819 = vmatprep.subr.mxu0 0.0
    %820 = vmatpush1.msra.mxu0 0.0
    %821 = vmatprep.subr.mxu0 0.0
    %822 = vmatpush1.msra.mxu0 0.0
    %823 = vmatprep.subr.mxu0 0.0
    %824 = vmatpush1.msra.mxu0 0.0
    %825 = vmatprep.mubr.f32.mxu0 0.0
    %826 = vmatmul.mubr.f32.gmra.mrb[0].mxu0 %v759
    %v827 = vpop.f32.mrb[0].mxu0
    %v828 = vadd.f32 0.0, %v827
    %v829 = vpop.f32.mrb[0].mxu0
    %830 = vdwg.mxu0
    %v831 = vadd.f32 %v756, %v828
    %v832 = vxor.u32 %v831, 2147483648
    %v833 = vmul.f32 %v832, 1.442695
    %v834 = vpow.pop %v833
    %v835 = vadd.f32 %v834, 1.0
    %v836 = vrcp.pop %v835
    %v837 = vmul.f32 1.0, %v836
    %v838 = vtanh.pop %v831
    %v839 = vmul.f32 %v837, %v570
    %841 = vrot.lane.b32.xlu0 %v838, 64
    %v842 = vpop.permute.xlu0 %841
    %v844 = vmul.f32 %v837, %v842
    %846 = vrot.lane.b32.xlu0 %v844, 32
    %v847 = vpop.permute.xlu0 %846
    %v849 = vadd.f32 %v839, %v847
    %v850 = vtanh.pop %v849
    %852 = vrot.lane.b32.xlu0 %v850, 64
    %v853 = vpop.permute.xlu0 %852
    %v855 = vmul.f32 %v837, %v853
    %857 = vrot.lane.b32.xlu0 %v855, 32
    %v858 = vpop.permute.xlu0 %857
    %860 = vst.msk [vmem:[%s7 + $0x4] sm:$0x3] %vm295, %v858
    %861 = vmatprep.subr.mxu0 0.0
    %862 = vmatpush1.msra.mxu0 %v73
    %863 = vmatprep.subr.mxu0 0.0
    %864 = vmatpush1.msra.mxu0 %v74
    %865 = vmatprep.subr.mxu0 0.0
    %866 = vmatpush1.msra.mxu0 %v75
    %867 = vmatprep.subr.mxu0 0.0
    %868 = vmatpush1.msra.mxu0 %v76
    %869 = vmatprep.subr.mxu0 0.0
    %870 = vmatpush1.msra.mxu0 0.0
    %871 = vmatprep.subr.mxu0 0.0
    %872 = vmatpush1.msra.mxu0 0.0
    %873 = vmatprep.subr.mxu0 0.0
    %874 = vmatpush1.msra.mxu0 0.0
    %875 = vmatprep.subr.mxu0 0.0
    %876 = vmatpush1.msra.mxu0 0.0
    %877 = vmatprep.subr.mxu0 0.0
    %878 = vmatpush1.msra.mxu0 0.0
    %879 = vmatprep.subr.mxu0 0.0
    %880 = vmatpush1.msra.mxu0 0.0
    %881 = vmatprep.subr.mxu0 0.0
    %882 = vmatpush1.msra.mxu0 0.0
    %883 = vmatprep.subr.mxu0 0.0
    %884 = vmatpush1.msra.mxu0 0.0
    %885 = vmatprep.subr.mxu0 0.0
    %886 = vmatpush1.msra.mxu0 0.0
    %887 = vmatprep.subr.mxu0 0.0
    %888 = vmatpush1.msra.mxu0 0.0
    %889 = vmatprep.subr.mxu0 0.0
    %890 = vmatpush1.msra.mxu0 0.0
    %891 = vmatprep.subr.mxu0 0.0
    %892 = vmatpush1.msra.mxu0 0.0
    %893 = vmatprep.subr.mxu0 0.0
    %894 = vmatpush1.msra.mxu0 0.0
    %895 = vmatprep.subr.mxu0 0.0
    %896 = vmatpush1.msra.mxu0 0.0
    %897 = vmatprep.subr.mxu0 0.0
    %898 = vmatpush1.msra.mxu0 0.0
    %899 = vmatprep.subr.mxu0 0.0
    %900 = vmatpush1.msra.mxu0 0.0
    %901 = vmatprep.subr.mxu0 0.0
    %902 = vmatpush1.msra.mxu0 0.0
    %903 = vmatprep.subr.mxu0 0.0
    %904 = vmatpush1.msra.mxu0 0.0
    %905 = vmatprep.subr.mxu0 0.0
    %906 = vmatpush1.msra.mxu0 0.0
    %907 = vmatprep.subr.mxu0 0.0
    %908 = vmatpush1.msra.mxu0 0.0
    %909 = vmatprep.subr.mxu0 0.0
    %910 = vmatpush1.msra.mxu0 0.0
    %911 = vmatprep.subr.mxu0 0.0
    %912 = vmatpush1.msra.mxu0 0.0
    %913 = vmatprep.subr.mxu0 0.0
    %914 = vmatpush1.msra.mxu0 0.0
    %915 = vmatprep.subr.mxu0 0.0
    %916 = vmatpush1.msra.mxu0 0.0
    %917 = vmatprep.subr.mxu0 0.0
    %918 = vmatpush1.msra.mxu0 0.0
    %919 = vmatprep.subr.mxu0 0.0
    %920 = vmatpush1.msra.mxu0 0.0
    %921 = vmatprep.subr.mxu0 0.0
    %922 = vmatpush1.msra.mxu0 0.0
    %923 = vmatprep.subr.mxu0 0.0
    %924 = vmatpush1.msra.mxu0 0.0
    %925 = vmatprep.mubr.f32.mxu0 0.0
    %926 = vmatmul.mubr.f32.gmra.mrb[0].mxu0 %v687
    %v927 = vpop.f32.mrb[0].mxu0
    %v928 = vadd.f32 0.0, %v927
    %v929 = vpop.f32.mrb[0].mxu0
    %930 = vdwg.mxu0
    %v932 = vrot.slane %v928, 2
    %v934 = vadd.f32 %v165, %v932
    %v935 = vxor.u32 %v934, 2147483648
    %v936 = vmul.f32 %v935, 1.442695
    %v937 = vpow.pop %v936
    %v938 = vadd.f32 %v937, 1.0
    %v939 = vrcp.pop %v938
    %v940 = vmul.f32 1.0, %v939
    %v941 = vtanh.pop %v934
    %v943 = vrot.slane %v676, 6
    %v945 = vmul.f32 %v940, %v943
    %947 = vrot.lane.b32.xlu0 %v941, 64
    %v948 = vpop.permute.xlu0 %947
    %v950 = vmul.f32 %v940, %v948
    %952 = vrot.lane.b32.xlu0 %v950, 32
    %v953 = vpop.permute.xlu0 %952
    %v955 = vadd.f32 %v945, %v953
    %v956 = vtanh.pop %v955
    %958 = vrot.lane.b32.xlu0 %v956, 64
    %v959 = vpop.permute.xlu0 %958
    %v961 = vmul.f32 %v940, %v959
    %v963 = vrot.slane %v961, 6
    %964 = vrot.lane.b32.xlu0 %v963, 32
    %v965 = vpop.permute.xlu0 %964
    %v966 = vsel %vm200, %v965, 0
    %968 = vmatprep.subr.mxu0 0.0
    %969 = vmatpush1.msra.mxu0 %v69
    %970 = vmatprep.subr.mxu0 0.0
    %971 = vmatpush1.msra.mxu0 %v70
    %972 = vmatprep.subr.mxu0 0.0
    %973 = vmatpush1.msra.mxu0 %v71
    %974 = vmatprep.subr.mxu0 0.0
    %975 = vmatpush1.msra.mxu0 %v72
    %976 = vmatprep.subr.mxu0 0.0
    %977 = vmatpush1.msra.mxu0 0.0
    %978 = vmatprep.subr.mxu0 0.0
    %979 = vmatpush1.msra.mxu0 0.0
    %980 = vmatprep.subr.mxu0 0.0
    %981 = vmatpush1.msra.mxu0 0.0
    %982 = vmatprep.subr.mxu0 0.0
    %983 = vmatpush1.msra.mxu0 0.0
    %984 = vmatprep.subr.mxu0 0.0
    %985 = vmatpush1.msra.mxu0 0.0
    %986 = vmatprep.subr.mxu0 0.0
    %987 = vmatpush1.msra.mxu0 0.0
    %988 = vmatprep.subr.mxu0 0.0
    %989 = vmatpush1.msra.mxu0 0.0
    %990 = vmatprep.subr.mxu0 0.0
    %991 = vmatpush1.msra.mxu0 0.0
    %992 = vmatprep.subr.mxu0 0.0
    %993 = vmatpush1.msra.mxu0 0.0
    %994 = vmatprep.subr.mxu0 0.0
    %995 = vmatpush1.msra.mxu0 0.0
    %996 = vmatprep.subr.mxu0 0.0
    %997 = vmatpush1.msra.mxu0 0.0
    %998 = vmatprep.subr.mxu0 0.0
    %999 = vmatpush1.msra.mxu0 0.0
    %1000 = vmatprep.subr.mxu0 0.0
    %1001 = vmatpush1.msra.mxu0 0.0
    %1002 = vmatprep.subr.mxu0 0.0
    %1003 = vmatpush1.msra.mxu0 0.0
    %1004 = vmatprep.subr.mxu0 0.0
    %1005 = vmatpush1.msra.mxu0 0.0
    %1006 = vmatprep.subr.mxu0 0.0
    %1007 = vmatpush1.msra.mxu0 0.0
    %1008 = vmatprep.subr.mxu0 0.0
    %1009 = vmatpush1.msra.mxu0 0.0
    %1010 = vmatprep.subr.mxu0 0.0
    %1011 = vmatpush1.msra.mxu0 0.0
    %1012 = vmatprep.subr.mxu0 0.0
    %1013 = vmatpush1.msra.mxu0 0.0
    %1014 = vmatprep.subr.mxu0 0.0
    %1015 = vmatpush1.msra.mxu0 0.0
    %1016 = vmatprep.subr.mxu0 0.0
    %1017 = vmatpush1.msra.mxu0 0.0
    %1018 = vmatprep.subr.mxu0 0.0
    %1019 = vmatpush1.msra.mxu0 0.0
    %1020 = vmatprep.subr.mxu0 0.0
    %1021 = vmatpush1.msra.mxu0 0.0
    %1022 = vmatprep.subr.mxu0 0.0
    %1023 = vmatpush1.msra.mxu0 0.0
    %1024 = vmatprep.subr.mxu0 0.0
    %1025 = vmatpush1.msra.mxu0 0.0
    %1026 = vmatprep.subr.mxu0 0.0
    %1027 = vmatpush1.msra.mxu0 0.0
    %1028 = vmatprep.subr.mxu0 0.0
    %1029 = vmatpush1.msra.mxu0 0.0
    %1030 = vmatprep.subr.mxu0 0.0
    %1031 = vmatpush1.msra.mxu0 0.0
    %1032 = vmatprep.mubr.f32.mxu0 0.0
    %1033 = vmatmul.mubr.f32.gmra.mrb[0].mxu0 %v966
    %v1034 = vpop.f32.mrb[0].mxu0
    %v1035 = vadd.f32 %v195, %v1034
    %v1036 = vpop.f32.mrb[0].mxu0
    %1037 = vdwg.mxu0
    %v1038 = vsel %vm200, %v858, 0
    %1040 = vmatprep.subr.mxu0 0.0
    %1041 = vmatpush1.msra.mxu0 %v77
    %1042 = vmatprep.subr.mxu0 0.0
    %1043 = vmatpush1.msra.mxu0 %v78
    %1044 = vmatprep.subr.mxu0 0.0
    %1045 = vmatpush1.msra.mxu0 %v79
    %1046 = vmatprep.subr.mxu0 0.0
    %1047 = vmatpush1.msra.mxu0 %v80
    %1048 = vmatprep.subr.mxu0 0.0
    %1049 = vmatpush1.msra.mxu0 0.0
    %1050 = vmatprep.subr.mxu0 0.0
    %1051 = vmatpush1.msra.mxu0 0.0
    %1052 = vmatprep.subr.mxu0 0.0
    %1053 = vmatpush1.msra.mxu0 0.0
    %1054 = vmatprep.subr.mxu0 0.0
    %1055 = vmatpush1.msra.mxu0 0.0
    %1056 = vmatprep.subr.mxu0 0.0
    %1057 = vmatpush1.msra.mxu0 0.0
    %1058 = vmatprep.subr.mxu0 0.0
    %1059 = vmatpush1.msra.mxu0 0.0
    %1060 = vmatprep.subr.mxu0 0.0
    %1061 = vmatpush1.msra.mxu0 0.0
    %1062 = vmatprep.subr.mxu0 0.0
    %1063 = vmatpush1.msra.mxu0 0.0
    %1064 = vmatprep.subr.mxu0 0.0
    %1065 = vmatpush1.msra.mxu0 0.0
    %1066 = vmatprep.subr.mxu0 0.0
    %1067 = vmatpush1.msra.mxu0 0.0
    %1068 = vmatprep.subr.mxu0 0.0
    %1069 = vmatpush1.msra.mxu0 0.0
    %1070 = vmatprep.subr.mxu0 0.0
    %1071 = vmatpush1.msra.mxu0 0.0
    %1072 = vmatprep.subr.mxu0 0.0
    %1073 = vmatpush1.msra.mxu0 0.0
    %1074 = vmatprep.subr.mxu0 0.0
    %1075 = vmatpush1.msra.mxu0 0.0
    %1076 = vmatprep.subr.mxu0 0.0
    %1077 = vmatpush1.msra.mxu0 0.0
    %1078 = vmatprep.subr.mxu0 0.0
    %1079 = vmatpush1.msra.mxu0 0.0
    %1080 = vmatprep.subr.mxu0 0.0
    %1081 = vmatpush1.msra.mxu0 0.0
    %1082 = vmatprep.subr.mxu0 0.0
    %1083 = vmatpush1.msra.mxu0 0.0
    %1084 = vmatprep.subr.mxu0 0.0
    %1085 = vmatpush1.msra.mxu0 0.0
    %1086 = vmatprep.subr.mxu0 0.0
    %1087 = vmatpush1.msra.mxu0 0.0
    %1088 = vmatprep.subr.mxu0 0.0
    %1089 = vmatpush1.msra.mxu0 0.0
    %1090 = vmatprep.subr.mxu0 0.0
    %1091 = vmatpush1.msra.mxu0 0.0
    %1092 = vmatprep.subr.mxu0 0.0
    %1093 = vmatpush1.msra.mxu0 0.0
    %1094 = vmatprep.subr.mxu0 0.0
    %1095 = vmatpush1.msra.mxu0 0.0
    %1096 = vmatprep.subr.mxu0 0.0
    %1097 = vmatpush1.msra.mxu0 0.0
    %1098 = vmatprep.subr.mxu0 0.0
    %1099 = vmatpush1.msra.mxu0 0.0
    %1100 = vmatprep.subr.mxu0 0.0
    %1101 = vmatpush1.msra.mxu0 0.0
    %1102 = vmatprep.subr.mxu0 0.0
    %1103 = vmatpush1.msra.mxu0 0.0
    %1104 = vmatprep.mubr.f32.mxu0 0.0
    %1105 = vmatmul.mubr.f32.gmra.mrb[0].mxu0 %v1038
    %v1106 = vpop.f32.mrb[0].mxu0
    %v1107 = vadd.f32 0.0, %v1106
    %v1108 = vpop.f32.mrb[0].mxu0
    %1109 = vdwg.mxu0
    %v1110 = vadd.f32 %v1035, %v1107
    %v1111 = vxor.u32 %v1110, 2147483648
    %v1112 = vmul.f32 %v1111, 1.442695
    %v1113 = vpow.pop %v1112
    %v1114 = vadd.f32 %v1113, 1.0
    %v1115 = vrcp.pop %v1114
    %v1116 = vmul.f32 1.0, %v1115
    %v1117 = vtanh.pop %v1110
    %v1118 = vmul.f32 %v1116, %v849
    %1120 = vrot.lane.b32.xlu0 %v1117, 64
    %v1121 = vpop.permute.xlu0 %1120
    %v1123 = vmul.f32 %v1116, %v1121
    %1125 = vrot.lane.b32.xlu0 %v1123, 32
    %v1126 = vpop.permute.xlu0 %1125
    %v1128 = vadd.f32 %v1118, %v1126
    %v1129 = vtanh.pop %v1128
    %1131 = vrot.lane.b32.xlu0 %v1129, 64
    %v1132 = vpop.permute.xlu0 %1131
    %v1134 = vmul.f32 %v1116, %v1132
    %1136 = vrot.lane.b32.xlu0 %v1134, 32
    %v1137 = vpop.permute.xlu0 %1136
    %1139 = vst.msk [vmem:[%s7 + $0x6] sm:$0x3] %vm295, %v1137
    %1140 = vmatprep.subr.mxu0 0.0
    %1141 = vmatpush1.msra.mxu0 %v73
    %1142 = vmatprep.subr.mxu0 0.0
    %1143 = vmatpush1.msra.mxu0 %v74
    %1144 = vmatprep.subr.mxu0 0.0
    %1145 = vmatpush1.msra.mxu0 %v75
    %1146 = vmatprep.subr.mxu0 0.0
    %1147 = vmatpush1.msra.mxu0 %v76
    %1148 = vmatprep.subr.mxu0 0.0
    %1149 = vmatpush1.msra.mxu0 0.0
    %1150 = vmatprep.subr.mxu0 0.0
    %1151 = vmatpush1.msra.mxu0 0.0
    %1152 = vmatprep.subr.mxu0 0.0
    %1153 = vmatpush1.msra.mxu0 0.0
    %1154 = vmatprep.subr.mxu0 0.0
    %1155 = vmatpush1.msra.mxu0 0.0
    %1156 = vmatprep.subr.mxu0 0.0
    %1157 = vmatpush1.msra.mxu0 0.0
    %1158 = vmatprep.subr.mxu0 0.0
    %1159 = vmatpush1.msra.mxu0 0.0
    %1160 = vmatprep.subr.mxu0 0.0
    %1161 = vmatpush1.msra.mxu0 0.0
    %1162 = vmatprep.subr.mxu0 0.0
    %1163 = vmatpush1.msra.mxu0 0.0
    %1164 = vmatprep.subr.mxu0 0.0
    %1165 = vmatpush1.msra.mxu0 0.0
    %1166 = vmatprep.subr.mxu0 0.0
    %1167 = vmatpush1.msra.mxu0 0.0
    %1168 = vmatprep.subr.mxu0 0.0
    %1169 = vmatpush1.msra.mxu0 0.0
    %1170 = vmatprep.subr.mxu0 0.0
    %1171 = vmatpush1.msra.mxu0 0.0
    %1172 = vmatprep.subr.mxu0 0.0
    %1173 = vmatpush1.msra.mxu0 0.0
    %1174 = vmatprep.subr.mxu0 0.0
    %1175 = vmatpush1.msra.mxu0 0.0
    %1176 = vmatprep.subr.mxu0 0.0
    %1177 = vmatpush1.msra.mxu0 0.0
    %1178 = vmatprep.subr.mxu0 0.0
    %1179 = vmatpush1.msra.mxu0 0.0
    %1180 = vmatprep.subr.mxu0 0.0
    %1181 = vmatpush1.msra.mxu0 0.0
    %1182 = vmatprep.subr.mxu0 0.0
    %1183 = vmatpush1.msra.mxu0 0.0
    %1184 = vmatprep.subr.mxu0 0.0
    %1185 = vmatpush1.msra.mxu0 0.0
    %1186 = vmatprep.subr.mxu0 0.0
    %1187 = vmatpush1.msra.mxu0 0.0
    %1188 = vmatprep.subr.mxu0 0.0
    %1189 = vmatpush1.msra.mxu0 0.0
    %1190 = vmatprep.subr.mxu0 0.0
    %1191 = vmatpush1.msra.mxu0 0.0
    %1192 = vmatprep.subr.mxu0 0.0
    %1193 = vmatpush1.msra.mxu0 0.0
    %1194 = vmatprep.subr.mxu0 0.0
    %1195 = vmatpush1.msra.mxu0 0.0
    %1196 = vmatprep.subr.mxu0 0.0
    %1197 = vmatpush1.msra.mxu0 0.0
    %1198 = vmatprep.subr.mxu0 0.0
    %1199 = vmatpush1.msra.mxu0 0.0
    %1200 = vmatprep.subr.mxu0 0.0
    %1201 = vmatpush1.msra.mxu0 0.0
    %1202 = vmatprep.subr.mxu0 0.0
    %1203 = vmatpush1.msra.mxu0 0.0
    %1204 = vmatprep.mubr.f32.mxu0 0.0
    %1205 = vmatmul.mubr.f32.gmra.mrb[0].mxu0 %v966
    %v1206 = vpop.f32.mrb[0].mxu0
    %v1207 = vadd.f32 0.0, %v1206
    %v1208 = vpop.f32.mrb[0].mxu0
    %1209 = vdwg.mxu0
    %v1210 = vadd.f32 %v170, %v1207
    %v1211 = vxor.u32 %v1210, 2147483648
    %v1212 = vmul.f32 %v1211, 1.442695
    %v1213 = vpow.pop %v1212
    %v1214 = vadd.f32 %v1213, 1.0
    %v1215 = vrcp.pop %v1214
    %v1216 = vmul.f32 1.0, %v1215
    %v1217 = vtanh.pop %v1210
    %v1219 = vrot.slane %v955, 6
    %v1221 = vmul.f32 %v1216, %v1219
    %1223 = vrot.lane.b32.xlu0 %v1217, 64
    %v1224 = vpop.permute.xlu0 %1223
    %v1226 = vmul.f32 %v1216, %v1224
    %1228 = vrot.lane.b32.xlu0 %v1226, 32
    %v1229 = vpop.permute.xlu0 %1228
    %v1231 = vadd.f32 %v1221, %v1229
    %v1232 = vtanh.pop %v1231
    %1234 = vrot.lane.b32.xlu0 %v1232, 64
    %v1235 = vpop.permute.xlu0 %1234
    %v1237 = vmul.f32 %v1216, %v1235
    %1239 = vrot.lane.b32.xlu0 %v1237, 32
    %v1240 = vpop.permute.xlu0 %1239
    %v1241 = vsel %vm200, %v1240, 0
    %1243 = vmatprep.subr.mxu0 0.0
    %1244 = vmatpush1.msra.mxu0 %v69
    %1245 = vmatprep.subr.mxu0 0.0
    %1246 = vmatpush1.msra.mxu0 %v70
    %1247 = vmatprep.subr.mxu0 0.0
    %1248 = vmatpush1.msra.mxu0 %v71
    %1249 = vmatprep.subr.mxu0 0.0
    %1250 = vmatpush1.msra.mxu0 %v72
    %1251 = vmatprep.subr.mxu0 0.0
    %1252 = vmatpush1.msra.mxu0 0.0
    %1253 = vmatprep.subr.mxu0 0.0
    %1254 = vmatpush1.msra.mxu0 0.0
    %1255 = vmatprep.subr.mxu0 0.0
    %1256 = vmatpush1.msra.mxu0 0.0
    %1257 = vmatprep.subr.mxu0 0.0
    %1258 = vmatpush1.msra.mxu0 0.0
    %1259 = vmatprep.subr.mxu0 0.0
    %1260 = vmatpush1.msra.mxu0 0.0
    %1261 = vmatprep.subr.mxu0 0.0
    %1262 = vmatpush1.msra.mxu0 0.0
    %1263 = vmatprep.subr.mxu0 0.0
    %1264 = vmatpush1.msra.mxu0 0.0
    %1265 = vmatprep.subr.mxu0 0.0
    %1266 = vmatpush1.msra.mxu0 0.0
    %1267 = vmatprep.subr.mxu0 0.0
    %1268 = vmatpush1.msra.mxu0 0.0
    %1269 = vmatprep.subr.mxu0 0.0
    %1270 = vmatpush1.msra.mxu0 0.0
    %1271 = vmatprep.subr.mxu0 0.0
    %1272 = vmatpush1.msra.mxu0 0.0
    %1273 = vmatprep.subr.mxu0 0.0
    %1274 = vmatpush1.msra.mxu0 0.0
    %1275 = vmatprep.subr.mxu0 0.0
    %1276 = vmatpush1.msra.mxu0 0.0
    %1277 = vmatprep.subr.mxu0 0.0
    %1278 = vmatpush1.msra.mxu0 0.0
    %1279 = vmatprep.subr.mxu0 0.0
    %1280 = vmatpush1.msra.mxu0 0.0
    %1281 = vmatprep.subr.mxu0 0.0
    %1282 = vmatpush1.msra.mxu0 0.0
    %1283 = vmatprep.subr.mxu0 0.0
    %1284 = vmatpush1.msra.mxu0 0.0
    %1285 = vmatprep.subr.mxu0 0.0
    %1286 = vmatpush1.msra.mxu0 0.0
    %1287 = vmatprep.subr.mxu0 0.0
    %1288 = vmatpush1.msra.mxu0 0.0
    %1289 = vmatprep.subr.mxu0 0.0
    %1290 = vmatpush1.msra.mxu0 0.0
    %1291 = vmatprep.subr.mxu0 0.0
    %1292 = vmatpush1.msra.mxu0 0.0
    %1293 = vmatprep.subr.mxu0 0.0
    %1294 = vmatpush1.msra.mxu0 0.0
    %1295 = vmatprep.subr.mxu0 0.0
    %1296 = vmatpush1.msra.mxu0 0.0
    %1297 = vmatprep.subr.mxu0 0.0
    %1298 = vmatpush1.msra.mxu0 0.0
    %1299 = vmatprep.subr.mxu0 0.0
    %1300 = vmatpush1.msra.mxu0 0.0
    %1301 = vmatprep.subr.mxu0 0.0
    %1302 = vmatpush1.msra.mxu0 0.0
    %1303 = vmatprep.subr.mxu0 0.0
    %1304 = vmatpush1.msra.mxu0 0.0
    %1305 = vmatprep.subr.mxu0 0.0
    %1306 = vmatpush1.msra.mxu0 0.0
    %1307 = vmatprep.mubr.f32.mxu0 0.0
    %1308 = vmatmul.mubr.f32.gmra.mrb[0].mxu0 %v1241
    %v1309 = vpop.f32.mrb[0].mxu0
    %v1310 = vadd.f32 %v195, %v1309
    %v1311 = vpop.f32.mrb[0].mxu0
    %1312 = vdwg.mxu0
    %v1313 = vsel %vm200, %v1137, 0
    %1315 = vmatprep.subr.mxu0 0.0
    %1316 = vmatpush1.msra.mxu0 %v77
    %1317 = vmatprep.subr.mxu0 0.0
    %1318 = vmatpush1.msra.mxu0 %v78
    %1319 = vmatprep.subr.mxu0 0.0
    %1320 = vmatpush1.msra.mxu0 %v79
    %1321 = vmatprep.subr.mxu0 0.0
    %1322 = vmatpush1.msra.mxu0 %v80
    %1323 = vmatprep.subr.mxu0 0.0
    %1324 = vmatpush1.msra.mxu0 0.0
    %1325 = vmatprep.subr.mxu0 0.0
    %1326 = vmatpush1.msra.mxu0 0.0
    %1327 = vmatprep.subr.mxu0 0.0
    %1328 = vmatpush1.msra.mxu0 0.0
    %1329 = vmatprep.subr.mxu0 0.0
    %1330 = vmatpush1.msra.mxu0 0.0
    %1331 = vmatprep.subr.mxu0 0.0
    %1332 = vmatpush1.msra.mxu0 0.0
    %1333 = vmatprep.subr.mxu0 0.0
    %1334 = vmatpush1.msra.mxu0 0.0
    %1335 = vmatprep.subr.mxu0 0.0
    %1336 = vmatpush1.msra.mxu0 0.0
    %1337 = vmatprep.subr.mxu0 0.0
    %1338 = vmatpush1.msra.mxu0 0.0
    %1339 = vmatprep.subr.mxu0 0.0
    %1340 = vmatpush1.msra.mxu0 0.0
    %1341 = vmatprep.subr.mxu0 0.0
    %1342 = vmatpush1.msra.mxu0 0.0
    %1343 = vmatprep.subr.mxu0 0.0
    %1344 = vmatpush1.msra.mxu0 0.0
    %1345 = vmatprep.subr.mxu0 0.0
    %1346 = vmatpush1.msra.mxu0 0.0
    %1347 = vmatprep.subr.mxu0 0.0
    %1348 = vmatpush1.msra.mxu0 0.0
    %1349 = vmatprep.subr.mxu0 0.0
    %1350 = vmatpush1.msra.mxu0 0.0
    %1351 = vmatprep.subr.mxu0 0.0
    %1352 = vmatpush1.msra.mxu0 0.0
    %1353 = vmatprep.subr.mxu0 0.0
    %1354 = vmatpush1.msra.mxu0 0.0
    %1355 = vmatprep.subr.mxu0 0.0
    %1356 = vmatpush1.msra.mxu0 0.0
    %1357 = vmatprep.subr.mxu0 0.0
    %1358 = vmatpush1.msra.mxu0 0.0
    %1359 = vmatprep.subr.mxu0 0.0
    %1360 = vmatpush1.msra.mxu0 0.0
    %1361 = vmatprep.subr.mxu0 0.0
    %1362 = vmatpush1.msra.mxu0 0.0
    %1363 = vmatprep.subr.mxu0 0.0
    %1364 = vmatpush1.msra.mxu0 0.0
    %1365 = vmatprep.subr.mxu0 0.0
    %1366 = vmatpush1.msra.mxu0 0.0
    %1367 = vmatprep.subr.mxu0 0.0
    %1368 = vmatpush1.msra.mxu0 0.0
    %1369 = vmatprep.subr.mxu0 0.0
    %1370 = vmatpush1.msra.mxu0 0.0
    %1371 = vmatprep.subr.mxu0 0.0
    %1372 = vmatpush1.msra.mxu0 0.0
    %1373 = vmatprep.subr.mxu0 0.0
    %1374 = vmatpush1.msra.mxu0 0.0
    %1375 = vmatprep.subr.mxu0 0.0
    %1376 = vmatpush1.msra.mxu0 0.0
    %1377 = vmatprep.subr.mxu0 0.0
    %1378 = vmatpush1.msra.mxu0 0.0
    %1379 = vmatprep.mubr.f32.mxu0 0.0
    %1380 = vmatmul.mubr.f32.gmra.mrb[0].mxu0 %v1313
    %v1381 = vpop.f32.mrb[0].mxu0
    %v1382 = vadd.f32 0.0, %v1381
    %v1383 = vpop.f32.mrb[0].mxu0
    %1384 = vdwg.mxu0
    %v1385 = vadd.f32 %v1310, %v1382
    %v1386 = vxor.u32 %v1385, 2147483648
    %v1387 = vmul.f32 %v1386, 1.442695
    %v1388 = vpow.pop %v1387
    %v1389 = vadd.f32 %v1388, 1.0
    %v1390 = vrcp.pop %v1389
    %v1391 = vmul.f32 1.0, %v1390
    %v1392 = vtanh.pop %v1385
    %v1393 = vmul.f32 %v1391, %v1128
    %1395 = vrot.lane.b32.xlu0 %v1392, 64
    %v1396 = vpop.permute.xlu0 %1395
    %v1398 = vmul.f32 %v1391, %v1396
    %1400 = vrot.lane.b32.xlu0 %v1398, 32
    %v1401 = vpop.permute.xlu0 %1400
    %v1403 = vadd.f32 %v1393, %v1401
    %v1404 = vtanh.pop %v1403
    %1406 = vrot.lane.b32.xlu0 %v1404, 64
    %v1407 = vpop.permute.xlu0 %1406
    %v1409 = vmul.f32 %v1391, %v1407
    %1411 = vrot.lane.b32.xlu0 %v1409, 32
    %v1412 = vpop.permute.xlu0 %1411
    %1414 = vst.msk [vmem:[%s7 + $0x8] sm:$0x3] %vm295, %v1412
    %1415 = vmatprep.subr.mxu0 0.0
    %1416 = vmatpush1.msra.mxu0 %v73
    %1417 = vmatprep.subr.mxu0 0.0
    %1418 = vmatpush1.msra.mxu0 %v74
    %1419 = vmatprep.subr.mxu0 0.0
    %1420 = vmatpush1.msra.mxu0 %v75
    %1421 = vmatprep.subr.mxu0 0.0
    %1422 = vmatpush1.msra.mxu0 %v76
    %1423 = vmatprep.subr.mxu0 0.0
    %1424 = vmatpush1.msra.mxu0 0.0
    %1425 = vmatprep.subr.mxu0 0.0
    %1426 = vmatpush1.msra.mxu0 0.0
    %1427 = vmatprep.subr.mxu0 0.0
    %1428 = vmatpush1.msra.mxu0 0.0
    %1429 = vmatprep.subr.mxu0 0.0
    %1430 = vmatpush1.msra.mxu0 0.0
    %1431 = vmatprep.subr.mxu0 0.0
    %1432 = vmatpush1.msra.mxu0 0.0
    %1433 = vmatprep.subr.mxu0 0.0
    %1434 = vmatpush1.msra.mxu0 0.0
    %1435 = vmatprep.subr.mxu0 0.0
    %1436 = vmatpush1.msra.mxu0 0.0
    %1437 = vmatprep.subr.mxu0 0.0
    %1438 = vmatpush1.msra.mxu0 0.0
    %1439 = vmatprep.subr.mxu0 0.0
    %1440 = vmatpush1.msra.mxu0 0.0
    %1441 = vmatprep.subr.mxu0 0.0
    %1442 = vmatpush1.msra.mxu0 0.0
    %1443 = vmatprep.subr.mxu0 0.0
    %1444 = vmatpush1.msra.mxu0 0.0
    %1445 = vmatprep.subr.mxu0 0.0
    %1446 = vmatpush1.msra.mxu0 0.0
    %1447 = vmatprep.subr.mxu0 0.0
    %1448 = vmatpush1.msra.mxu0 0.0
    %1449 = vmatprep.subr.mxu0 0.0
    %1450 = vmatpush1.msra.mxu0 0.0
    %1451 = vmatprep.subr.mxu0 0.0
    %1452 = vmatpush1.msra.mxu0 0.0
    %1453 = vmatprep.subr.mxu0 0.0
    %1454 = vmatpush1.msra.mxu0 0.0
    %1455 = vmatprep.subr.mxu0 0.0
    %1456 = vmatpush1.msra.mxu0 0.0
    %1457 = vmatprep.subr.mxu0 0.0
    %1458 = vmatpush1.msra.mxu0 0.0
    %1459 = vmatprep.subr.mxu0 0.0
    %1460 = vmatpush1.msra.mxu0 0.0
    %1461 = vmatprep.subr.mxu0 0.0
    %1462 = vmatpush1.msra.mxu0 0.0
    %1463 = vmatprep.subr.mxu0 0.0
    %1464 = vmatpush1.msra.mxu0 0.0
    %1465 = vmatprep.subr.mxu0 0.0
    %1466 = vmatpush1.msra.mxu0 0.0
    %1467 = vmatprep.subr.mxu0 0.0
    %1468 = vmatpush1.msra.mxu0 0.0
    %1469 = vmatprep.subr.mxu0 0.0
    %1470 = vmatpush1.msra.mxu0 0.0
    %1471 = vmatprep.subr.mxu0 0.0
    %1472 = vmatpush1.msra.mxu0 0.0
    %1473 = vmatprep.subr.mxu0 0.0
    %1474 = vmatpush1.msra.mxu0 0.0
    %1475 = vmatprep.subr.mxu0 0.0
    %1476 = vmatpush1.msra.mxu0 0.0
    %1477 = vmatprep.subr.mxu0 0.0
    %1478 = vmatpush1.msra.mxu0 0.0
    %1479 = vmatprep.mubr.f32.mxu0 0.0
    %1480 = vmatmul.mubr.f32.gmra.mrb[0].mxu0 %v1241
    %v1481 = vpop.f32.mrb[0].mxu0
    %v1482 = vadd.f32 0.0, %v1481
    %v1483 = vpop.f32.mrb[0].mxu0
    %1484 = vdwg.mxu0
    %v1486 = vrot.slane %v1482, 6
    %v1488 = vadd.f32 %v170, %v1486
    %v1489 = vxor.u32 %v1488, 2147483648
    %v1490 = vmul.f32 %v1489, 1.442695
    %v1491 = vpow.pop %v1490
    %v1492 = vadd.f32 %v1491, 1.0
    %v1493 = vrcp.pop %v1492
    %v1494 = vmul.f32 1.0, %v1493
    %v1495 = vtanh.pop %v1488
    %v1497 = vrot.slane %v1231, 6
    %v1499 = vmul.f32 %v1494, %v1497
    %1501 = vrot.lane.b32.xlu0 %v1495, 64
    %v1502 = vpop.permute.xlu0 %1501
    %v1504 = vmul.f32 %v1494, %v1502
    %1506 = vrot.lane.b32.xlu0 %v1504, 32
    %v1507 = vpop.permute.xlu0 %1506
    %v1509 = vadd.f32 %v1499, %v1507
    %v1510 = vtanh.pop %v1509
    %1512 = vrot.lane.b32.xlu0 %v1510, 64
    %v1513 = vpop.permute.xlu0 %1512
    %v1515 = vmul.f32 %v1494, %v1513
    %v1517 = vrot.slane %v1515, 2
    %1518 = vrot.lane.b32.xlu0 %v1517, 32
    %v1519 = vpop.permute.xlu0 %1518
    %v1520 = vsel %vm200, %v1519, 0
    %1522 = vmatprep.subr.mxu0 0.0
    %1523 = vmatpush1.msra.mxu0 %v69
    %1524 = vmatprep.subr.mxu0 0.0
    %1525 = vmatpush1.msra.mxu0 %v70
    %1526 = vmatprep.subr.mxu0 0.0
    %1527 = vmatpush1.msra.mxu0 %v71
    %1528 = vmatprep.subr.mxu0 0.0
    %1529 = vmatpush1.msra.mxu0 %v72
    %1530 = vmatprep.subr.mxu0 0.0
    %1531 = vmatpush1.msra.mxu0 0.0
    %1532 = vmatprep.subr.mxu0 0.0
    %1533 = vmatpush1.msra.mxu0 0.0
    %1534 = vmatprep.subr.mxu0 0.0
    %1535 = vmatpush1.msra.mxu0 0.0
    %1536 = vmatprep.subr.mxu0 0.0
    %1537 = vmatpush1.msra.mxu0 0.0
    %1538 = vmatprep.subr.mxu0 0.0
    %1539 = vmatpush1.msra.mxu0 0.0
    %1540 = vmatprep.subr.mxu0 0.0
    %1541 = vmatpush1.msra.mxu0 0.0
    %1542 = vmatprep.subr.mxu0 0.0
    %1543 = vmatpush1.msra.mxu0 0.0
    %1544 = vmatprep.subr.mxu0 0.0
    %1545 = vmatpush1.msra.mxu0 0.0
    %1546 = vmatprep.subr.mxu0 0.0
    %1547 = vmatpush1.msra.mxu0 0.0
    %1548 = vmatprep.subr.mxu0 0.0
    %1549 = vmatpush1.msra.mxu0 0.0
    %1550 = vmatprep.subr.mxu0 0.0
    %1551 = vmatpush1.msra.mxu0 0.0
    %1552 = vmatprep.subr.mxu0 0.0
    %1553 = vmatpush1.msra.mxu0 0.0
    %1554 = vmatprep.subr.mxu0 0.0
    %1555 = vmatpush1.msra.mxu0 0.0
    %1556 = vmatprep.subr.mxu0 0.0
    %1557 = vmatpush1.msra.mxu0 0.0
    %1558 = vmatprep.subr.mxu0 0.0
    %1559 = vmatpush1.msra.mxu0 0.0
    %1560 = vmatprep.subr.mxu0 0.0
    %1561 = vmatpush1.msra.mxu0 0.0
    %1562 = vmatprep.subr.mxu0 0.0
    %1563 = vmatpush1.msra.mxu0 0.0
    %1564 = vmatprep.subr.mxu0 0.0
    %1565 = vmatpush1.msra.mxu0 0.0
    %1566 = vmatprep.subr.mxu0 0.0
    %1567 = vmatpush1.msra.mxu0 0.0
    %1568 = vmatprep.subr.mxu0 0.0
    %1569 = vmatpush1.msra.mxu0 0.0
    %1570 = vmatprep.subr.mxu0 0.0
    %1571 = vmatpush1.msra.mxu0 0.0
    %1572 = vmatprep.subr.mxu0 0.0
    %1573 = vmatpush1.msra.mxu0 0.0
    %1574 = vmatprep.subr.mxu0 0.0
    %1575 = vmatpush1.msra.mxu0 0.0
    %1576 = vmatprep.subr.mxu0 0.0
    %1577 = vmatpush1.msra.mxu0 0.0
    %1578 = vmatprep.subr.mxu0 0.0
    %1579 = vmatpush1.msra.mxu0 0.0
    %1580 = vmatprep.subr.mxu0 0.0
    %1581 = vmatpush1.msra.mxu0 0.0
    %1582 = vmatprep.subr.mxu0 0.0
    %1583 = vmatpush1.msra.mxu0 0.0
    %1584 = vmatprep.subr.mxu0 0.0
    %1585 = vmatpush1.msra.mxu0 0.0
    %1586 = vmatprep.mubr.f32.mxu0 0.0
    %1587 = vmatmul.mubr.f32.gmra.mrb[0].mxu0 %v1520
    %v1588 = vpop.f32.mrb[0].mxu0
    %v1589 = vadd.f32 %v195, %v1588
    %v1590 = vpop.f32.mrb[0].mxu0
    %1591 = vdwg.mxu0
    %v1592 = vsel %vm200, %v1412, 0
    %1594 = vmatprep.subr.mxu0 0.0
    %1595 = vmatpush1.msra.mxu0 %v77
    %1596 = vmatprep.subr.mxu0 0.0
    %1597 = vmatpush1.msra.mxu0 %v78
    %1598 = vmatprep.subr.mxu0 0.0
    %1599 = vmatpush1.msra.mxu0 %v79
    %1600 = vmatprep.subr.mxu0 0.0
    %1601 = vmatpush1.msra.mxu0 %v80
    %1602 = vmatprep.subr.mxu0 0.0
    %1603 = vmatpush1.msra.mxu0 0.0
    %1604 = vmatprep.subr.mxu0 0.0
    %1605 = vmatpush1.msra.mxu0 0.0
    %1606 = vmatprep.subr.mxu0 0.0
    %1607 = vmatpush1.msra.mxu0 0.0
    %1608 = vmatprep.subr.mxu0 0.0
    %1609 = vmatpush1.msra.mxu0 0.0
    %1610 = vmatprep.subr.mxu0 0.0
    %1611 = vmatpush1.msra.mxu0 0.0
    %1612 = vmatprep.subr.mxu0 0.0
    %1613 = vmatpush1.msra.mxu0 0.0
    %1614 = vmatprep.subr.mxu0 0.0
    %1615 = vmatpush1.msra.mxu0 0.0
    %1616 = vmatprep.subr.mxu0 0.0
    %1617 = vmatpush1.msra.mxu0 0.0
    %1618 = vmatprep.subr.mxu0 0.0
    %1619 = vmatpush1.msra.mxu0 0.0
    %1620 = vmatprep.subr.mxu0 0.0
    %1621 = vmatpush1.msra.mxu0 0.0
    %1622 = vmatprep.subr.mxu0 0.0
    %1623 = vmatpush1.msra.mxu0 0.0
    %1624 = vmatprep.subr.mxu0 0.0
    %1625 = vmatpush1.msra.mxu0 0.0
    %1626 = vmatprep.subr.mxu0 0.0
    %1627 = vmatpush1.msra.mxu0 0.0
    %1628 = vmatprep.subr.mxu0 0.0
    %1629 = vmatpush1.msra.mxu0 0.0
    %1630 = vmatprep.subr.mxu0 0.0
    %1631 = vmatpush1.msra.mxu0 0.0
    %1632 = vmatprep.subr.mxu0 0.0
    %1633 = vmatpush1.msra.mxu0 0.0
    %1634 = vmatprep.subr.mxu0 0.0
    %1635 = vmatpush1.msra.mxu0 0.0
    %1636 = vmatprep.subr.mxu0 0.0
    %1637 = vmatpush1.msra.mxu0 0.0
    %1638 = vmatprep.subr.mxu0 0.0
    %1639 = vmatpush1.msra.mxu0 0.0
    %1640 = vmatprep.subr.mxu0 0.0
    %1641 = vmatpush1.msra.mxu0 0.0
    %1642 = vmatprep.subr.mxu0 0.0
    %1643 = vmatpush1.msra.mxu0 0.0
    %1644 = vmatprep.subr.mxu0 0.0
    %1645 = vmatpush1.msra.mxu0 0.0
    %1646 = vmatprep.subr.mxu0 0.0
    %1647 = vmatpush1.msra.mxu0 0.0
    %1648 = vmatprep.subr.mxu0 0.0
    %1649 = vmatpush1.msra.mxu0 0.0
    %1650 = vmatprep.subr.mxu0 0.0
    %1651 = vmatpush1.msra.mxu0 0.0
    %1652 = vmatprep.subr.mxu0 0.0
    %1653 = vmatpush1.msra.mxu0 0.0
    %1654 = vmatprep.subr.mxu0 0.0
    %1655 = vmatpush1.msra.mxu0 0.0
    %1656 = vmatprep.subr.mxu0 0.0
    %1657 = vmatpush1.msra.mxu0 0.0
    %1658 = vmatprep.mubr.f32.mxu0 0.0
    %1659 = vmatmul.mubr.f32.gmra.mrb[0].mxu0 %v1592
    %v1660 = vpop.f32.mrb[0].mxu0
    %v1661 = vadd.f32 0.0, %v1660
    %v1662 = vpop.f32.mrb[0].mxu0
    %1663 = vdwg.mxu0
    %v1664 = vadd.f32 %v1589, %v1661
    %v1665 = vxor.u32 %v1664, 2147483648
    %v1666 = vmul.f32 %v1665, 1.442695
    %v1667 = vpow.pop %v1666
    %v1668 = vadd.f32 %v1667, 1.0
    %v1669 = vrcp.pop %v1668
    %v1670 = vmul.f32 1.0, %v1669
    %v1671 = vtanh.pop %v1664
    %v1672 = vmul.f32 %v1670, %v1403
    %1674 = vrot.lane.b32.xlu0 %v1671, 64
    %v1675 = vpop.permute.xlu0 %1674
    %v1677 = vmul.f32 %v1670, %v1675
    %1679 = vrot.lane.b32.xlu0 %v1677, 32
    %v1680 = vpop.permute.xlu0 %1679
    %v1682 = vadd.f32 %v1672, %v1680
    %v1683 = vtanh.pop %v1682
    %1685 = vrot.lane.b32.xlu0 %v1683, 64
    %v1686 = vpop.permute.xlu0 %1685
    %v1688 = vmul.f32 %v1670, %v1686
    %1690 = vrot.lane.b32.xlu0 %v1688, 32
    %v1691 = vpop.permute.xlu0 %1690
    %1693 = vst.msk [vmem:[%s7 + $0xa] sm:$0x3] %vm295, %v1691
    %1694 = vmatprep.subr.mxu0 0.0
    %1695 = vmatpush1.msra.mxu0 %v73
    %1696 = vmatprep.subr.mxu0 0.0
    %1697 = vmatpush1.msra.mxu0 %v74
    %1698 = vmatprep.subr.mxu0 0.0
    %1699 = vmatpush1.msra.mxu0 %v75
    %1700 = vmatprep.subr.mxu0 0.0
    %1701 = vmatpush1.msra.mxu0 %v76
    %1702 = vmatprep.subr.mxu0 0.0
    %1703 = vmatpush1.msra.mxu0 0.0
    %1704 = vmatprep.subr.mxu0 0.0
    %1705 = vmatpush1.msra.mxu0 0.0
    %1706 = vmatprep.subr.mxu0 0.0
    %1707 = vmatpush1.msra.mxu0 0.0
    %1708 = vmatprep.subr.mxu0 0.0
    %1709 = vmatpush1.msra.mxu0 0.0
    %1710 = vmatprep.subr.mxu0 0.0
    %1711 = vmatpush1.msra.mxu0 0.0
    %1712 = vmatprep.subr.mxu0 0.0
    %1713 = vmatpush1.msra.mxu0 0.0
    %1714 = vmatprep.subr.mxu0 0.0
    %1715 = vmatpush1.msra.mxu0 0.0
    %1716 = vmatprep.subr.mxu0 0.0
    %1717 = vmatpush1.msra.mxu0 0.0
    %1718 = vmatprep.subr.mxu0 0.0
    %1719 = vmatpush1.msra.mxu0 0.0
    %1720 = vmatprep.subr.mxu0 0.0
    %1721 = vmatpush1.msra.mxu0 0.0
    %1722 = vmatprep.subr.mxu0 0.0
    %1723 = vmatpush1.msra.mxu0 0.0
    %1724 = vmatprep.subr.mxu0 0.0
    %1725 = vmatpush1.msra.mxu0 0.0
    %1726 = vmatprep.subr.mxu0 0.0
    %1727 = vmatpush1.msra.mxu0 0.0
    %1728 = vmatprep.subr.mxu0 0.0
    %1729 = vmatpush1.msra.mxu0 0.0
    %1730 = vmatprep.subr.mxu0 0.0
    %1731 = vmatpush1.msra.mxu0 0.0
    %1732 = vmatprep.subr.mxu0 0.0
    %1733 = vmatpush1.msra.mxu0 0.0
    %1734 = vmatprep.subr.mxu0 0.0
    %1735 = vmatpush1.msra.mxu0 0.0
    %1736 = vmatprep.subr.mxu0 0.0
    %1737 = vmatpush1.msra.mxu0 0.0
    %1738 = vmatprep.subr.mxu0 0.0
    %1739 = vmatpush1.msra.mxu0 0.0
    %1740 = vmatprep.subr.mxu0 0.0
    %1741 = vmatpush1.msra.mxu0 0.0
    %1742 = vmatprep.subr.mxu0 0.0
    %1743 = vmatpush1.msra.mxu0 0.0
    %1744 = vmatprep.subr.mxu0 0.0
    %1745 = vmatpush1.msra.mxu0 0.0
    %1746 = vmatprep.subr.mxu0 0.0
    %1747 = vmatpush1.msra.mxu0 0.0
    %1748 = vmatprep.subr.mxu0 0.0
    %1749 = vmatpush1.msra.mxu0 0.0
    %1750 = vmatprep.subr.mxu0 0.0
    %1751 = vmatpush1.msra.mxu0 0.0
    %1752 = vmatprep.subr.mxu0 0.0
    %1753 = vmatpush1.msra.mxu0 0.0
    %1754 = vmatprep.subr.mxu0 0.0
    %1755 = vmatpush1.msra.mxu0 0.0
    %1756 = vmatprep.subr.mxu0 0.0
    %1757 = vmatpush1.msra.mxu0 0.0
    %1758 = vmatprep.mubr.f32.mxu0 0.0
    %1759 = vmatmul.mubr.f32.gmra.mrb[0].mxu0 %v1520
    %v1760 = vpop.f32.mrb[0].mxu0
    %v1761 = vadd.f32 0.0, %v1760
    %v1762 = vpop.f32.mrb[0].mxu0
    %1763 = vdwg.mxu0
    %v1765 = vrot.slane %v1761, 4
    %v1767 = vadd.f32 %v170, %v1765
    %v1768 = vxor.u32 %v1767, 2147483648
    %v1769 = vmul.f32 %v1768, 1.442695
    %v1770 = vpow.pop %v1769
    %v1771 = vadd.f32 %v1770, 1.0
    %v1772 = vrcp.pop %v1771
    %v1773 = vmul.f32 1.0, %v1772
    %v1774 = vtanh.pop %v1767
    %v1776 = vrot.slane %v1509, 6
    %v1778 = vmul.f32 %v1773, %v1776
    %1780 = vrot.lane.b32.xlu0 %v1774, 64
    %v1781 = vpop.permute.xlu0 %1780
    %v1783 = vmul.f32 %v1773, %v1781
    %1785 = vrot.lane.b32.xlu0 %v1783, 32
    %v1786 = vpop.permute.xlu0 %1785
    %v1788 = vadd.f32 %v1778, %v1786
    %v1789 = vtanh.pop %v1788
    %1791 = vrot.lane.b32.xlu0 %v1789, 64
    %v1792 = vpop.permute.xlu0 %1791
    %v1794 = vmul.f32 %v1773, %v1792
    %v1796 = vrot.slane %v1794, 4
    %1797 = vrot.lane.b32.xlu0 %v1796, 32
    %v1798 = vpop.permute.xlu0 %1797
    %v1799 = vsel %vm200, %v1798, 0
    %1801 = vmatprep.subr.mxu0 0.0
    %1802 = vmatpush1.msra.mxu0 %v69
    %1803 = vmatprep.subr.mxu0 0.0
    %1804 = vmatpush1.msra.mxu0 %v70
    %1805 = vmatprep.subr.mxu0 0.0
    %1806 = vmatpush1.msra.mxu0 %v71
    %1807 = vmatprep.subr.mxu0 0.0
    %1808 = vmatpush1.msra.mxu0 %v72
    %1809 = vmatprep.subr.mxu0 0.0
    %1810 = vmatpush1.msra.mxu0 0.0
    %1811 = vmatprep.subr.mxu0 0.0
    %1812 = vmatpush1.msra.mxu0 0.0
    %1813 = vmatprep.subr.mxu0 0.0
    %1814 = vmatpush1.msra.mxu0 0.0
    %1815 = vmatprep.subr.mxu0 0.0
    %1816 = vmatpush1.msra.mxu0 0.0
    %1817 = vmatprep.subr.mxu0 0.0
    %1818 = vmatpush1.msra.mxu0 0.0
    %1819 = vmatprep.subr.mxu0 0.0
    %1820 = vmatpush1.msra.mxu0 0.0
    %1821 = vmatprep.subr.mxu0 0.0
    %1822 = vmatpush1.msra.mxu0 0.0
    %1823 = vmatprep.subr.mxu0 0.0
    %1824 = vmatpush1.msra.mxu0 0.0
    %1825 = vmatprep.subr.mxu0 0.0
    %1826 = vmatpush1.msra.mxu0 0.0
    %1827 = vmatprep.subr.mxu0 0.0
    %1828 = vmatpush1.msra.mxu0 0.0
    %1829 = vmatprep.subr.mxu0 0.0
    %1830 = vmatpush1.msra.mxu0 0.0
    %1831 = vmatprep.subr.mxu0 0.0
    %1832 = vmatpush1.msra.mxu0 0.0
    %1833 = vmatprep.subr.mxu0 0.0
    %1834 = vmatpush1.msra.mxu0 0.0
    %1835 = vmatprep.subr.mxu0 0.0
    %1836 = vmatpush1.msra.mxu0 0.0
    %1837 = vmatprep.subr.mxu0 0.0
    %1838 = vmatpush1.msra.mxu0 0.0
    %1839 = vmatprep.subr.mxu0 0.0
    %1840 = vmatpush1.msra.mxu0 0.0
    %1841 = vmatprep.subr.mxu0 0.0
    %1842 = vmatpush1.msra.mxu0 0.0
    %1843 = vmatprep.subr.mxu0 0.0
    %1844 = vmatpush1.msra.mxu0 0.0
    %1845 = vmatprep.subr.mxu0 0.0
    %1846 = vmatpush1.msra.mxu0 0.0
    %1847 = vmatprep.subr.mxu0 0.0
    %1848 = vmatpush1.msra.mxu0 0.0
    %1849 = vmatprep.subr.mxu0 0.0
    %1850 = vmatpush1.msra.mxu0 0.0
    %1851 = vmatprep.subr.mxu0 0.0
    %1852 = vmatpush1.msra.mxu0 0.0
    %1853 = vmatprep.subr.mxu0 0.0
    %1854 = vmatpush1.msra.mxu0 0.0
    %1855 = vmatprep.subr.mxu0 0.0
    %1856 = vmatpush1.msra.mxu0 0.0
    %1857 = vmatprep.subr.mxu0 0.0
    %1858 = vmatpush1.msra.mxu0 0.0
    %1859 = vmatprep.subr.mxu0 0.0
    %1860 = vmatpush1.msra.mxu0 0.0
    %1861 = vmatprep.subr.mxu0 0.0
    %1862 = vmatpush1.msra.mxu0 0.0
    %1863 = vmatprep.subr.mxu0 0.0
    %1864 = vmatpush1.msra.mxu0 0.0
    %1865 = vmatprep.mubr.f32.mxu0 0.0
    %1866 = vmatmul.mubr.f32.gmra.mrb[0].mxu0 %v1799
    %v1867 = vpop.f32.mrb[0].mxu0
    %v1868 = vadd.f32 %v195, %v1867
    %v1869 = vpop.f32.mrb[0].mxu0
    %1870 = vdwg.mxu0
    %v1871 = vsel %vm200, %v1691, 0
    %1873 = vmatprep.subr.mxu0 0.0
    %1874 = vmatpush1.msra.mxu0 %v77
    %1875 = vmatprep.subr.mxu0 0.0
    %1876 = vmatpush1.msra.mxu0 %v78
    %1877 = vmatprep.subr.mxu0 0.0
    %1878 = vmatpush1.msra.mxu0 %v79
    %1879 = vmatprep.subr.mxu0 0.0
    %1880 = vmatpush1.msra.mxu0 %v80
    %1881 = vmatprep.subr.mxu0 0.0
    %1882 = vmatpush1.msra.mxu0 0.0
    %1883 = vmatprep.subr.mxu0 0.0
    %1884 = vmatpush1.msra.mxu0 0.0
    %1885 = vmatprep.subr.mxu0 0.0
    %1886 = vmatpush1.msra.mxu0 0.0
    %1887 = vmatprep.subr.mxu0 0.0
    %1888 = vmatpush1.msra.mxu0 0.0
    %1889 = vmatprep.subr.mxu0 0.0
    %1890 = vmatpush1.msra.mxu0 0.0
    %1891 = vmatprep.subr.mxu0 0.0
    %1892 = vmatpush1.msra.mxu0 0.0
    %1893 = vmatprep.subr.mxu0 0.0
    %1894 = vmatpush1.msra.mxu0 0.0
    %1895 = vmatprep.subr.mxu0 0.0
    %1896 = vmatpush1.msra.mxu0 0.0
    %1897 = vmatprep.subr.mxu0 0.0
    %1898 = vmatpush1.msra.mxu0 0.0
    %1899 = vmatprep.subr.mxu0 0.0
    %1900 = vmatpush1.msra.mxu0 0.0
    %1901 = vmatprep.subr.mxu0 0.0
    %1902 = vmatpush1.msra.mxu0 0.0
    %1903 = vmatprep.subr.mxu0 0.0
    %1904 = vmatpush1.msra.mxu0 0.0
    %1905 = vmatprep.subr.mxu0 0.0
    %1906 = vmatpush1.msra.mxu0 0.0
    %1907 = vmatprep.subr.mxu0 0.0
    %1908 = vmatpush1.msra.mxu0 0.0
    %1909 = vmatprep.subr.mxu0 0.0
    %1910 = vmatpush1.msra.mxu0 0.0
    %1911 = vmatprep.subr.mxu0 0.0
    %1912 = vmatpush1.msra.mxu0 0.0
    %1913 = vmatprep.subr.mxu0 0.0
    %1914 = vmatpush1.msra.mxu0 0.0
    %1915 = vmatprep.subr.mxu0 0.0
    %1916 = vmatpush1.msra.mxu0 0.0
    %1917 = vmatprep.subr.mxu0 0.0
    %1918 = vmatpush1.msra.mxu0 0.0
    %1919 = vmatprep.subr.mxu0 0.0
    %1920 = vmatpush1.msra.mxu0 0.0
    %1921 = vmatprep.subr.mxu0 0.0
    %1922 = vmatpush1.msra.mxu0 0.0
    %1923 = vmatprep.subr.mxu0 0.0
    %1924 = vmatpush1.msra.mxu0 0.0
    %1925 = vmatprep.subr.mxu0 0.0
    %1926 = vmatpush1.msra.mxu0 0.0
    %1927 = vmatprep.subr.mxu0 0.0
    %1928 = vmatpush1.msra.mxu0 0.0
    %1929 = vmatprep.subr.mxu0 0.0
    %1930 = vmatpush1.msra.mxu0 0.0
    %1931 = vmatprep.subr.mxu0 0.0
    %1932 = vmatpush1.msra.mxu0 0.0
    %1933 = vmatprep.subr.mxu0 0.0
    %1934 = vmatpush1.msra.mxu0 0.0
    %1935 = vmatprep.subr.mxu0 0.0
    %1936 = vmatpush1.msra.mxu0 0.0
    %1937 = vmatprep.mubr.f32.mxu0 0.0
    %1938 = vmatmul.mubr.f32.gmra.mrb[0].mxu0 %v1871
    %v1939 = vpop.f32.mrb[0].mxu0
    %v1940 = vadd.f32 0.0, %v1939
    %v1941 = vpop.f32.mrb[0].mxu0
    %1942 = vdwg.mxu0
    %v1943 = vadd.f32 %v1868, %v1940
    %v1944 = vxor.u32 %v1943, 2147483648
    %v1945 = vmul.f32 %v1944, 1.442695
    %v1946 = vpow.pop %v1945
    %v1947 = vadd.f32 %v1946, 1.0
    %v1948 = vrcp.pop %v1947
    %v1949 = vmul.f32 1.0, %v1948
    %v1950 = vtanh.pop %v1943
    %v1951 = vmul.f32 %v1949, %v1682
    %1953 = vrot.lane.b32.xlu0 %v1950, 64
    %v1954 = vpop.permute.xlu0 %1953
    %v1956 = vmul.f32 %v1949, %v1954
    %1958 = vrot.lane.b32.xlu0 %v1956, 32
    %v1959 = vpop.permute.xlu0 %1958
    %v1961 = vadd.f32 %v1951, %v1959
    %v1962 = vtanh.pop %v1961
    %1964 = vrot.lane.b32.xlu0 %v1962, 64
    %v1965 = vpop.permute.xlu0 %1964
    %v1967 = vmul.f32 %v1949, %v1965
    %1969 = vrot.lane.b32.xlu0 %v1967, 32
    %v1970 = vpop.permute.xlu0 %1969
    %1972 = vst.msk [vmem:[%s7 + $0xc] sm:$0x3] %vm295, %v1970
    %1973 = vmatprep.subr.mxu0 0.0
    %1974 = vmatpush1.msra.mxu0 %v73
    %1975 = vmatprep.subr.mxu0 0.0
    %1976 = vmatpush1.msra.mxu0 %v74
    %1977 = vmatprep.subr.mxu0 0.0
    %1978 = vmatpush1.msra.mxu0 %v75
    %1979 = vmatprep.subr.mxu0 0.0
    %1980 = vmatpush1.msra.mxu0 %v76
    %1981 = vmatprep.subr.mxu0 0.0
    %1982 = vmatpush1.msra.mxu0 0.0
    %1983 = vmatprep.subr.mxu0 0.0
    %1984 = vmatpush1.msra.mxu0 0.0
    %1985 = vmatprep.subr.mxu0 0.0
    %1986 = vmatpush1.msra.mxu0 0.0
    %1987 = vmatprep.subr.mxu0 0.0
    %1988 = vmatpush1.msra.mxu0 0.0
    %1989 = vmatprep.subr.mxu0 0.0
    %1990 = vmatpush1.msra.mxu0 0.0
    %1991 = vmatprep.subr.mxu0 0.0
    %1992 = vmatpush1.msra.mxu0 0.0
    %1993 = vmatprep.subr.mxu0 0.0
    %1994 = vmatpush1.msra.mxu0 0.0
    %1995 = vmatprep.subr.mxu0 0.0
    %1996 = vmatpush1.msra.mxu0 0.0
    %1997 = vmatprep.subr.mxu0 0.0
    %1998 = vmatpush1.msra.mxu0 0.0
    %1999 = vmatprep.subr.mxu0 0.0
    %2000 = vmatpush1.msra.mxu0 0.0
    %2001 = vmatprep.subr.mxu0 0.0
    %2002 = vmatpush1.msra.mxu0 0.0
    %2003 = vmatprep.subr.mxu0 0.0
    %2004 = vmatpush1.msra.mxu0 0.0
    %2005 = vmatprep.subr.mxu0 0.0
    %2006 = vmatpush1.msra.mxu0 0.0
    %2007 = vmatprep.subr.mxu0 0.0
    %2008 = vmatpush1.msra.mxu0 0.0
    %2009 = vmatprep.subr.mxu0 0.0
    %2010 = vmatpush1.msra.mxu0 0.0
    %2011 = vmatprep.subr.mxu0 0.0
    %2012 = vmatpush1.msra.mxu0 0.0
    %2013 = vmatprep.subr.mxu0 0.0
    %2014 = vmatpush1.msra.mxu0 0.0
    %2015 = vmatprep.subr.mxu0 0.0
    %2016 = vmatpush1.msra.mxu0 0.0
    %2017 = vmatprep.subr.mxu0 0.0
    %2018 = vmatpush1.msra.mxu0 0.0
    %2019 = vmatprep.subr.mxu0 0.0
    %2020 = vmatpush1.msra.mxu0 0.0
    %2021 = vmatprep.subr.mxu0 0.0
    %2022 = vmatpush1.msra.mxu0 0.0
    %2023 = vmatprep.subr.mxu0 0.0
    %2024 = vmatpush1.msra.mxu0 0.0
    %2025 = vmatprep.subr.mxu0 0.0
    %2026 = vmatpush1.msra.mxu0 0.0
    %2027 = vmatprep.subr.mxu0 0.0
    %2028 = vmatpush1.msra.mxu0 0.0
    %2029 = vmatprep.subr.mxu0 0.0
    %2030 = vmatpush1.msra.mxu0 0.0
    %2031 = vmatprep.subr.mxu0 0.0
    %2032 = vmatpush1.msra.mxu0 0.0
    %2033 = vmatprep.subr.mxu0 0.0
    %2034 = vmatpush1.msra.mxu0 0.0
    %2035 = vmatprep.subr.mxu0 0.0
    %2036 = vmatpush1.msra.mxu0 0.0
    %2037 = vmatprep.mubr.f32.mxu0 0.0
    %2038 = vmatmul.mubr.f32.gmra.mrb[0].mxu0 %v1799
    %v2039 = vpop.f32.mrb[0].mxu0
    %v2040 = vadd.f32 0.0, %v2039
    %v2041 = vpop.f32.mrb[0].mxu0
    %2042 = vdwg.mxu0
    %v2044 = vrot.slane %v2040, 2
    %v2046 = vadd.f32 %v170, %v2044
    %v2047 = vxor.u32 %v2046, 2147483648
    %v2048 = vmul.f32 %v2047, 1.442695
    %v2049 = vpow.pop %v2048
    %v2050 = vadd.f32 %v2049, 1.0
    %v2051 = vrcp.pop %v2050
    %v2052 = vmul.f32 1.0, %v2051
    %v2053 = vtanh.pop %v2046
    %v2055 = vrot.slane %v1788, 6
    %v2057 = vmul.f32 %v2052, %v2055
    %2059 = vrot.lane.b32.xlu0 %v2053, 64
    %v2060 = vpop.permute.xlu0 %2059
    %v2062 = vmul.f32 %v2052, %v2060
    %2064 = vrot.lane.b32.xlu0 %v2062, 32
    %v2065 = vpop.permute.xlu0 %2064
    %v2067 = vadd.f32 %v2057, %v2065
    %v2068 = vtanh.pop %v2067
    %2070 = vrot.lane.b32.xlu0 %v2068, 64
    %v2071 = vpop.permute.xlu0 %2070
    %v2073 = vmul.f32 %v2052, %v2071
    %v2075 = vrot.slane %v2073, 6
    %2076 = vrot.lane.b32.xlu0 %v2075, 32
    %v2077 = vpop.permute.xlu0 %2076
    %v2078 = vsel %vm200, %v2077, 0
    %2080 = vmatprep.subr.mxu0 0.0
    %2081 = vmatpush1.msra.mxu0 %v69
    %2082 = vmatprep.subr.mxu0 0.0
    %2083 = vmatpush1.msra.mxu0 %v70
    %2084 = vmatprep.subr.mxu0 0.0
    %2085 = vmatpush1.msra.mxu0 %v71
    %2086 = vmatprep.subr.mxu0 0.0
    %2087 = vmatpush1.msra.mxu0 %v72
    %2088 = vmatprep.subr.mxu0 0.0
    %2089 = vmatpush1.msra.mxu0 0.0
    %2090 = vmatprep.subr.mxu0 0.0
    %2091 = vmatpush1.msra.mxu0 0.0
    %2092 = vmatprep.subr.mxu0 0.0
    %2093 = vmatpush1.msra.mxu0 0.0
    %2094 = vmatprep.subr.mxu0 0.0
    %2095 = vmatpush1.msra.mxu0 0.0
    %2096 = vmatprep.subr.mxu0 0.0
    %2097 = vmatpush1.msra.mxu0 0.0
    %2098 = vmatprep.subr.mxu0 0.0
    %2099 = vmatpush1.msra.mxu0 0.0
    %2100 = vmatprep.subr.mxu0 0.0
    %2101 = vmatpush1.msra.mxu0 0.0
    %2102 = vmatprep.subr.mxu0 0.0
    %2103 = vmatpush1.msra.mxu0 0.0
    %2104 = vmatprep.subr.mxu0 0.0
    %2105 = vmatpush1.msra.mxu0 0.0
    %2106 = vmatprep.subr.mxu0 0.0
    %2107 = vmatpush1.msra.mxu0 0.0
    %2108 = vmatprep.subr.mxu0 0.0
    %2109 = vmatpush1.msra.mxu0 0.0
    %2110 = vmatprep.subr.mxu0 0.0
    %2111 = vmatpush1.msra.mxu0 0.0
    %2112 = vmatprep.subr.mxu0 0.0
    %2113 = vmatpush1.msra.mxu0 0.0
    %2114 = vmatprep.subr.mxu0 0.0
    %2115 = vmatpush1.msra.mxu0 0.0
    %2116 = vmatprep.subr.mxu0 0.0
    %2117 = vmatpush1.msra.mxu0 0.0
    %2118 = vmatprep.subr.mxu0 0.0
    %2119 = vmatpush1.msra.mxu0 0.0
    %2120 = vmatprep.subr.mxu0 0.0
    %2121 = vmatpush1.msra.mxu0 0.0
    %2122 = vmatprep.subr.mxu0 0.0
    %2123 = vmatpush1.msra.mxu0 0.0
    %2124 = vmatprep.subr.mxu0 0.0
    %2125 = vmatpush1.msra.mxu0 0.0
    %2126 = vmatprep.subr.mxu0 0.0
    %2127 = vmatpush1.msra.mxu0 0.0
    %2128 = vmatprep.subr.mxu0 0.0
    %2129 = vmatpush1.msra.mxu0 0.0
    %2130 = vmatprep.subr.mxu0 0.0
    %2131 = vmatpush1.msra.mxu0 0.0
    %2132 = vmatprep.subr.mxu0 0.0
    %2133 = vmatpush1.msra.mxu0 0.0
    %2134 = vmatprep.subr.mxu0 0.0
    %2135 = vmatpush1.msra.mxu0 0.0
    %2136 = vmatprep.subr.mxu0 0.0
    %2137 = vmatpush1.msra.mxu0 0.0
    %2138 = vmatprep.subr.mxu0 0.0
    %2139 = vmatpush1.msra.mxu0 0.0
    %2140 = vmatprep.subr.mxu0 0.0
    %2141 = vmatpush1.msra.mxu0 0.0
    %2142 = vmatprep.subr.mxu0 0.0
    %2143 = vmatpush1.msra.mxu0 0.0
    %2144 = vmatprep.mubr.f32.mxu0 0.0
    %2145 = vmatmul.mubr.f32.gmra.mrb[0].mxu0 %v2078
    %v2146 = vpop.f32.mrb[0].mxu0
    %v2147 = vadd.f32 %v195, %v2146
    %v2148 = vpop.f32.mrb[0].mxu0
    %2149 = vdwg.mxu0
    %v2150 = vsel %vm200, %v1970, 0
    %2152 = vmatprep.subr.mxu0 0.0
    %2153 = vmatpush1.msra.mxu0 %v77
    %2154 = vmatprep.subr.mxu0 0.0
    %2155 = vmatpush1.msra.mxu0 %v78
    %2156 = vmatprep.subr.mxu0 0.0
    %2157 = vmatpush1.msra.mxu0 %v79
    %2158 = vmatprep.subr.mxu0 0.0
    %2159 = vmatpush1.msra.mxu0 %v80
    %2160 = vmatprep.subr.mxu0 0.0
    %2161 = vmatpush1.msra.mxu0 0.0
    %2162 = vmatprep.subr.mxu0 0.0
    %2163 = vmatpush1.msra.mxu0 0.0
    %2164 = vmatprep.subr.mxu0 0.0
    %2165 = vmatpush1.msra.mxu0 0.0
    %2166 = vmatprep.subr.mxu0 0.0
    %2167 = vmatpush1.msra.mxu0 0.0
    %2168 = vmatprep.subr.mxu0 0.0
    %2169 = vmatpush1.msra.mxu0 0.0
    %2170 = vmatprep.subr.mxu0 0.0
    %2171 = vmatpush1.msra.mxu0 0.0
    %2172 = vmatprep.subr.mxu0 0.0
    %2173 = vmatpush1.msra.mxu0 0.0
    %2174 = vmatprep.subr.mxu0 0.0
    %2175 = vmatpush1.msra.mxu0 0.0
    %2176 = vmatprep.subr.mxu0 0.0
    %2177 = vmatpush1.msra.mxu0 0.0
    %2178 = vmatprep.subr.mxu0 0.0
    %2179 = vmatpush1.msra.mxu0 0.0
    %2180 = vmatprep.subr.mxu0 0.0
    %2181 = vmatpush1.msra.mxu0 0.0
    %2182 = vmatprep.subr.mxu0 0.0
    %2183 = vmatpush1.msra.mxu0 0.0
    %2184 = vmatprep.subr.mxu0 0.0
    %2185 = vmatpush1.msra.mxu0 0.0
    %2186 = vmatprep.subr.mxu0 0.0
    %2187 = vmatpush1.msra.mxu0 0.0
    %2188 = vmatprep.subr.mxu0 0.0
    %2189 = vmatpush1.msra.mxu0 0.0
    %2190 = vmatprep.subr.mxu0 0.0
    %2191 = vmatpush1.msra.mxu0 0.0
    %2192 = vmatprep.subr.mxu0 0.0
    %2193 = vmatpush1.msra.mxu0 0.0
    %2194 = vmatprep.subr.mxu0 0.0
    %2195 = vmatpush1.msra.mxu0 0.0
    %2196 = vmatprep.subr.mxu0 0.0
    %2197 = vmatpush1.msra.mxu0 0.0
    %2198 = vmatprep.subr.mxu0 0.0
    %2199 = vmatpush1.msra.mxu0 0.0
    %2200 = vmatprep.subr.mxu0 0.0
    %2201 = vmatpush1.msra.mxu0 0.0
    %2202 = vmatprep.subr.mxu0 0.0
    %2203 = vmatpush1.msra.mxu0 0.0
    %2204 = vmatprep.subr.mxu0 0.0
    %2205 = vmatpush1.msra.mxu0 0.0
    %2206 = vmatprep.subr.mxu0 0.0
    %2207 = vmatpush1.msra.mxu0 0.0
    %2208 = vmatprep.subr.mxu0 0.0
    %2209 = vmatpush1.msra.mxu0 0.0
    %2210 = vmatprep.subr.mxu0 0.0
    %2211 = vmatpush1.msra.mxu0 0.0
    %2212 = vmatprep.subr.mxu0 0.0
    %2213 = vmatpush1.msra.mxu0 0.0
    %2214 = vmatprep.subr.mxu0 0.0
    %2215 = vmatpush1.msra.mxu0 0.0
    %2216 = vmatprep.mubr.f32.mxu0 0.0
    %2217 = vmatmul.mubr.f32.gmra.mrb[0].mxu0 %v2150
    %v2218 = vpop.f32.mrb[0].mxu0
    %v2219 = vadd.f32 0.0, %v2218
    %v2220 = vpop.f32.mrb[0].mxu0
    %2221 = vdwg.mxu0
    %v2222 = vadd.f32 %v2147, %v2219
    %v2223 = vxor.u32 %v2222, 2147483648
    %v2224 = vmul.f32 %v2223, 1.442695
    %v2225 = vpow.pop %v2224
    %v2226 = vadd.f32 %v2225, 1.0
    %v2227 = vrcp.pop %v2226
    %v2228 = vmul.f32 1.0, %v2227
    %v2229 = vtanh.pop %v2222
    %v2230 = vmul.f32 %v2228, %v1961
    %2232 = vrot.lane.b32.xlu0 %v2229, 64
    %v2233 = vpop.permute.xlu0 %2232
    %v2235 = vmul.f32 %v2228, %v2233
    %2237 = vrot.lane.b32.xlu0 %v2235, 32
    %v2238 = vpop.permute.xlu0 %2237
    %v2240 = vadd.f32 %v2230, %v2238
    %v2241 = vtanh.pop %v2240
    %2243 = vrot.lane.b32.xlu0 %v2241, 64
    %v2244 = vpop.permute.xlu0 %2243
    %v2246 = vmul.f32 %v2228, %v2244
    %2248 = vrot.lane.b32.xlu0 %v2246, 32
    %v2249 = vpop.permute.xlu0 %2248
    %2251 = vst.msk [vmem:[%s7 + $0xe] sm:$0x3] %vm295, %v2249
    // Predicated region
    $region42: #{_fused_lstm_forward_impl.1} parent=1 // pred_check
      _
    $region43: #{_fused_lstm_forward_impl.1} parent=1 // pred_check_branch
      %2253 = sbr.rel (0) target = $region45
    $region44: #{_fused_lstm_forward_impl.1} parent=1 // pred_region
      _
    $region45: #{_fused_lstm_forward_impl.1} parent=1 // pred_fallthru
      _
    // Predicated region
    $region46: #{_fused_lstm_forward_impl.1} parent=1 // pred_check
      _
    $region47: #{_fused_lstm_forward_impl.1} parent=1 // pred_check_branch
      %2255 = sbr.rel (0) target = $region49
    $region48: #{_fused_lstm_forward_impl.1} parent=1 // pred_region
      _
    $region49: #{_fused_lstm_forward_impl.1} parent=1 // pred_fallthru
      _
    %2256 = vsyncpa [#allocation3], 1
    %2257 = vsyncpa [#allocation5], 1

</llo_original>
